<compile_context>
chip_gen: v5e
topology: v5e:2x2
jax: 0.10.0
libtpu: 0.0.40
codegen_flags: <defaults>
</compile_context>

<pallas_src>
import math

import numpy as np
import jax
import jax.numpy as jnp
from jax.experimental import pallas as pl
from jax.experimental.pallas import tpu as pltpu

BN_EPS = 1e-5
NEG_FILL = -1e30   # plain Python float (never a captured jnp constant)


# ---------------------------------------------------------------------------
# Fused Pallas kernel (one grid step == one graph):
#   conv1 -> conv2 -> lin1 -> global_mean_pool -> MLP head
# ---------------------------------------------------------------------------
def _dgcn_fused_kernel(
        x_ref,      # [n, Fp]             node features of this graph (padded)
        gmi_ref,    # [1, max_deg, n, n]  per-slot (gather - identity) matrices
        neg_ref,    # [n, max_deg]        additive pad mask (0 real / -1e30 pad)
        c1wa_ref, c1wb_ref, c1b1_ref, c1w2_ref, c1b2_ref,     # conv1 (BN folded)
        c2wa_ref, c2wb_ref, c2b1_ref, c2w2_ref, c2b2_ref,     # conv2 (BN folded)
        wl_ref, bl_ref,                                       # lin1  (BN folded)
        wha_ref, bha_ref, whb_ref, bhb_ref, whc_ref, bhc_ref,  # head
        out_ref):   # [1, 1, 1]
    n = x_ref.shape[0]
    max_deg = gmi_ref.shape[1]

    def edge_conv(node, wa_ref, wb_ref, b1_ref, w2_ref, b2_ref):
        """EdgeConv(MLP([2C, H, H]), aggr='max'), BN folded into the Linears.

        message(i, j) = relu(relu([x_i | x_j - x_i] @ W1 + b1) @ W2 + b2)
        By linearity the (x_j - x_i) branch is (G_d - I) @ (node @ Wb):
        one MXU matmul per slot, no per-row gather loop.
        """
        w2 = w2_ref[...]
        b2 = b2_ref[...]
        xi_part = (jnp.dot(node, wa_ref[...],
                           preferred_element_type=jnp.float32)
                   + b1_ref[...])                                     # [n, H]
        nwb = jnp.dot(node, wb_ref[...],
                      preferred_element_type=jnp.float32)             # [n, H]

        acc = None
        # NOTE: max_deg is tiny here; switch to lax.fori_loop if it grows.
        for d in range(max_deg):
            diff = jnp.dot(gmi_ref[0, d], nwb,
                           preferred_element_type=jnp.float32)        # [n, H]
            y = jnp.maximum(xi_part + diff, 0.0)
            msg = jnp.maximum(
                jnp.dot(y, w2, preferred_element_type=jnp.float32) + b2, 0.0)
            msg = msg + neg_ref[:, d:d + 1]        # mask out padded slots
            acc = msg if acc is None else jnp.maximum(acc, msg)
        return acc                                                    # [n, H]

    x1 = edge_conv(x_ref[...], c1wa_ref, c1wb_ref, c1b1_ref, c1w2_ref, c1b2_ref)
    x2 = edge_conv(x1, c2wa_ref, c2wb_ref, c2b1_ref, c2w2_ref, c2b2_ref)

    # lin1 on cat([x1, x2]) as one 64-lane-dense matmul
    x12 = jnp.concatenate([x1, x2], axis=1)                           # [n, 2H]
    z = jnp.maximum(
        jnp.dot(x12, wl_ref[...], preferred_element_type=jnp.float32)
        + bl_ref[...], 0.0)                                           # [n, M]

    # global mean pool over this graph's nodes
    g = jnp.sum(z, axis=0, keepdims=True) * (1.0 / n)                 # [1, M]

    # head MLP (Dropout = identity in eval mode), BN folded
    a = jnp.maximum(
        jnp.dot(g, wha_ref[...], preferred_element_type=jnp.float32)
        + bha_ref[...], 0.0)                                          # [1, M/4]
    b = jnp.maximum(
        jnp.dot(a, whb_ref[...], preferred_element_type=jnp.float32)
        + bhb_ref[...], 0.0)                                          # [1, M/8]
    out = (jnp.dot(b, whc_ref[...], preferred_element_type=jnp.float32)
           + bhc_ref[...])                                            # [1, 1]
    out_ref[0] = out


# ---------------------------------------------------------------------------
# pallas_call wrapper
# ---------------------------------------------------------------------------
def _const_spec(shape):
    nd = len(shape)
    return pl.BlockSpec(shape, lambda g, nd=nd: (0,) * nd)


def _fold_bn(w, b, s):
    # eval-mode BN after ReLU with zero shift: relu(x@w+b)*s == relu(x@(w*s)+b*s)
    return w * s, b * s


def _pad_rows(w, rows):
    extra = rows - w.shape[0]
    if extra > 0:
        w = jnp.concatenate([w, jnp.zeros((extra, w.shape[1]), w.dtype)], axis=0)
    return w


def dgcn_pallas_call(x_pad, gmi, neg, params, num_graphs, nodes_per_graph):
    Fp = x_pad.shape[1]
    max_deg = gmi.shape[1]
    H = params["conv1"]["w2"].shape[0]
    F = params["conv1"]["w1"].shape[0] // 2

    c1, c2 = params["conv1"], params["conv2"]
    c1w1, c1b1 = _fold_bn(c1["w1"], c1["b1"], c1["s1"])
    c1w2, c1b2 = _fold_bn(c1["w2"], c1["b2"], c1["s2"])
    c2w1, c2b1 = _fold_bn(c2["w1"], c2["b1"], c2["s1"])
    c2w2, c2b2 = _fold_bn(c2["w2"], c2["b2"], c2["s2"])
    wl, bl = _fold_bn(params["lin1"]["w"], params["lin1"]["b"], params["lin1"]["s"])
    m = params["mlp"]
    wha, bha = _fold_bn(m["wa"], m["ba"], m["sa"])
    whb, bhb = _fold_bn(m["wb"], m["bb"], m["sb"])
    whc, bhc = m["wc"], m["bc"]

    # split W1 into x_i / (x_j - x_i) halves; pad the conv1 halves to Fp rows
    c1wa = _pad_rows(c1w1[:F], Fp)
    c1wb = _pad_rows(c1w1[F:], Fp)
    c2wa, c2wb = c2w1[:H], c2w1[H:]

    arrays = (x_pad, gmi, neg,
              c1wa, c1wb, c1b1, c1w2, c1b2,
              c2wa, c2wb, c2b1, c2w2, c2b2,
              wl, bl, wha, bha, whb, bhb, whc, bhc)

    in_specs = [
        pl.BlockSpec((nodes_per_graph, Fp), lambda g: (g, 0)),
        pl.BlockSpec((1, max_deg, nodes_per_graph, nodes_per_graph),
                     lambda g: (g, 0, 0, 0)),
        pl.BlockSpec((nodes_per_graph, max_deg), lambda g: (g, 0)),
    ] + [_const_spec(a.shape) for a in arrays[3:]]

    out = pl.pallas_call(
        _dgcn_fused_kernel,
        out_shape=jax.ShapeDtypeStruct((num_graphs, 1, 1), jnp.float32),
        grid=(num_graphs,),
        in_specs=in_specs,
        out_specs=pl.BlockSpec((1, 1, 1), lambda g: (g, 0, 0)),
        compiler_params=pltpu.CompilerParams(
            dimension_semantics=("parallel",),
            vmem_limit_bytes=48 * 1024 * 1024),
    )(*arrays)
    return out.reshape(num_graphs)


# ---------------------------------------------------------------------------
# Host-side graph preprocessing (per-graph one-hot gather operators + pad mask)
# ---------------------------------------------------------------------------
def build_graph_operators(edge_index, num_nodes, num_graphs, nodes_per_graph):
    """Per-graph, per-slot (gather - identity) matrices and additive pad mask.

    Incoming edges of each node are laid out into `max_deg` slots; slot d of
    graph g is an [n, n] matrix G_d with G_d[tgt_local, src_local] = 1 (padded
    slots point at the node itself and carry an additive -1e30 mask).  The
    kernel uses (G_d - I) so that (x_j - x_i) @ Wb == (G_d - I) @ (x @ Wb).
    """
    ei = np.asarray(edge_index)
    src, tgt = ei[0].tolist(), ei[1].tolist()
    incoming = [[] for _ in range(num_nodes)]
    for s, t in zip(src, tgt):
        incoming[t].append(s)
    max_deg = max(1, max(len(lst) for lst in incoming))

    gmi = np.zeros((num_graphs, max_deg, nodes_per_graph, nodes_per_graph),
                   np.float32)
    neg = np.full((num_nodes, max_deg), NEG_FILL, np.float32)
    for i, lst in enumerate(incoming):
        g, il = divmod(i, nodes_per_graph)
        for d, s in enumerate(lst):
            sg, sl = divmod(s, nodes_per_graph)
            assert sg == g, "edges must not cross graph boundaries"
            gmi[g, d, il, sl] = 1.0
            neg[i, d] = 0.0
        for d in range(len(lst), max_deg):
            gmi[g, d, il, il] = 1.0          # self; contribution masked out
    gmi -= np.eye(nodes_per_graph, dtype=np.float32)[None, None]
    return jnp.asarray(gmi), jnp.asarray(neg), max_deg


def dgcn_forward(x, edge_index, batch, params, num_graphs):
    N, F = x.shape
    nodes_per_graph = N // num_graphs
    # TODO(synk): assumes equal-sized graphs with nodes ordered by graph id.
    assert np.array_equal(np.asarray(batch),
                          np.repeat(np.arange(num_graphs), nodes_per_graph))
    gmi, neg, _ = build_graph_operators(edge_index, N, num_graphs,
                                        nodes_per_graph)
    Fp = ((F + 7) // 8) * 8                 # pad features to full sublane group
    x_pad = x if Fp == F else jnp.concatenate(
        [x, jnp.zeros((N, Fp - F), x.dtype)], axis=1)
    return dgcn_pallas_call(x_pad, gmi, neg, params, num_graphs,
                            nodes_per_graph)


# ---------------------------------------------------------------------------
# Parameter init (deterministic, mirrors a freshly initialized PyTorch module)
# ---------------------------------------------------------------------------
def init_linear(key, fan_in, fan_out):
    k1, k2 = jax.random.split(key)
    bound = 1.0 / math.sqrt(fan_in)
    w = jax.random.uniform(k1, (fan_in, fan_out), jnp.float32, -bound, bound)
    b = jax.random.uniform(k2, (1, fan_out), jnp.float32, -bound, bound)
    return w, b


def init_bn(c):
    # eval-mode BN of a fresh BatchNorm1d: gamma=1, beta=0, mean=0, var=1
    s = jnp.full((1, c), 1.0 / math.sqrt(1.0 + BN_EPS), jnp.float32)
    t = jnp.zeros((1, c), jnp.float32)
    return s, t


def init_edgeconv_params(key, in_ch, hidden):
    k1, k2 = jax.random.split(key)
    w1, b1 = init_linear(k1, 2 * in_ch, hidden)
    s1, t1 = init_bn(hidden)
    w2, b2 = init_linear(k2, hidden, hidden)
    s2, t2 = init_bn(hidden)
    return dict(w1=w1, b1=b1, s1=s1, t1=t1, w2=w2, b2=b2, s2=s2, t2=t2)


def init_params(key, num_features, conv_hidden, mlp_hidden):
    ks = jax.random.split(key, 6)
    conv1 = init_edgeconv_params(ks[0], num_features, conv_hidden)
    conv2 = init_edgeconv_params(ks[1], conv_hidden, conv_hidden)
    wl, bl = init_linear(ks[2], 2 * conv_hidden, mlp_hidden)
    sl, tl = init_bn(mlp_hidden)
    lin1 = dict(w=wl, b=bl, s=sl, t=tl)
    m4, m8 = mlp_hidden // 4, mlp_hidden // 8
    wa, ba = init_linear(ks[3], mlp_hidden, m4)
    sa, ta = init_bn(m4)
    wb, bb = init_linear(ks[4], m4, m8)
    sb, tb = init_bn(m8)
    wc, bc = init_linear(ks[5], m8, 1)
    mlp = dict(wa=wa, ba=ba, sa=sa, ta=ta, wb=wb, bb=bb, sb=sb, tb=tb, wc=wc, bc=bc)
    return dict(conv1=conv1, conv2=conv2, lin1=lin1, mlp=mlp)


# ---------------------------------------------------------------------------
# Pure-JAX reference (unfolded Lin -> ReLU -> BN, edge-list segment max)
# ---------------------------------------------------------------------------
def reference_forward(x, edge_index, batch, params, num_graphs):
    src, tgt = edge_index[0], edge_index[1]
    N = x.shape[0]

    def mlp2(h, p):
        y = jnp.maximum(h @ p["w1"] + p["b1"], 0.0) * p["s1"] + p["t1"]
        y = jnp.maximum(y @ p["w2"] + p["b2"], 0.0) * p["s2"] + p["t2"]
        return y

    def econv(xx, p):
        xi, xj = xx[tgt], xx[src]
        msg = mlp2(jnp.concatenate([xi, xj - xi], axis=1), p)
        out = jnp.full((N, msg.shape[1]), -1e30, jnp.float32)
        return out.at[tgt].max(msg)

    x1 = econv(x, params["conv1"])
    x2 = econv(x1, params["conv2"])
    l1 = params["lin1"]
    z = jnp.maximum(jnp.concatenate([x1, x2], axis=1) @ l1["w"] + l1["b"], 0.0)
    z = z * l1["s"] + l1["t"]
    pool = (batch[None, :] == jnp.arange(num_graphs)[:, None]).astype(jnp.float32)
    pool = pool / jnp.sum(pool, axis=1, keepdims=True)
    g = pool @ z
    m = params["mlp"]
    a = jnp.maximum(g @ m["wa"] + m["ba"], 0.0) * m["sa"] + m["ta"]
    b = jnp.maximum(a @ m["wb"] + m["bb"], 0.0) * m["sb"] + m["tb"]
    return jnp.squeeze(b @ m["wc"] + m["bc"])


# ---------------------------------------------------------------------------
if __name__ == "__main__":
    # hyper-params: number_conv_layers=2, conv_hidden=32, mlp_hidden=32, aggr='max'
    num_features = 4
    conv_hidden = 32
    mlp_hidden = 32
    nodes_per_graph = 8
    num_graphs = 2
    N = num_graphs * nodes_per_graph

    key = jax.random.PRNGKey(0)
    k_x, k_p = jax.random.split(key)
    x = jax.random.normal(k_x, (N, num_features), jnp.float32)

    # ring graph inside each component (every node gets two incoming edges)
    src_list, tgt_list = [], []
    for g in range(num_graphs):
        base = g * nodes_per_graph
        for k in range(nodes_per_graph):
            i = base + k
            for d in (-1, 1):
                j = base + (k + d) % nodes_per_graph
                src_list.append(j)
                tgt_list.append(i)
    edge_index = jnp.array([src_list, tgt_list], dtype=jnp.int32)   # [2, 32]
    batch = jnp.repeat(jnp.arange(num_graphs, dtype=jnp.int32), nodes_per_graph)

    params = init_params(k_p, num_features, conv_hidden, mlp_hidden)

    out = jax.block_until_ready(
        dgcn_forward(x, edge_index, batch, params, num_graphs))
    ref = jax.block_until_ready(
        reference_forward(x, edge_index, batch, params, num_graphs))

    assert out.shape == (num_graphs,)
    assert jnp.allclose(out, ref, rtol=1e-4, atol=1e-4), (out, ref)
    print("KERNEL_OK")
</pallas_src>

<mosaic_0001>
module attributes {stable_mosaic.version = 11 : i64} {
  func.func @_dgcn_fused_kernel(%arg0: i32, %arg1: memref<8x8xf32, #tpu.memory_space<vmem>>, %arg2: memref<1x2x8x8xf32, #tpu.memory_space<vmem>>, %arg3: memref<8x2xf32, #tpu.memory_space<vmem>>, %arg4: memref<8x32xf32, #tpu.memory_space<vmem>>, %arg5: memref<8x32xf32, #tpu.memory_space<vmem>>, %arg6: memref<1x32xf32, #tpu.memory_space<vmem>>, %arg7: memref<32x32xf32, #tpu.memory_space<vmem>>, %arg8: memref<1x32xf32, #tpu.memory_space<vmem>>, %arg9: memref<32x32xf32, #tpu.memory_space<vmem>>, %arg10: memref<32x32xf32, #tpu.memory_space<vmem>>, %arg11: memref<1x32xf32, #tpu.memory_space<vmem>>, %arg12: memref<32x32xf32, #tpu.memory_space<vmem>>, %arg13: memref<1x32xf32, #tpu.memory_space<vmem>>, %arg14: memref<64x32xf32, #tpu.memory_space<vmem>>, %arg15: memref<1x32xf32, #tpu.memory_space<vmem>>, %arg16: memref<32x8xf32, #tpu.memory_space<vmem>>, %arg17: memref<1x8xf32, #tpu.memory_space<vmem>>, %arg18: memref<8x4xf32, #tpu.memory_space<vmem>>, %arg19: memref<1x4xf32, #tpu.memory_space<vmem>>, %arg20: memref<4x1xf32, #tpu.memory_space<vmem>>, %arg21: memref<1x1xf32, #tpu.memory_space<vmem>>, %arg22: memref<1x1x1xf32, #tpu.memory_space<vmem>>) attributes {dimension_semantics = [#tpu.dimension_semantics<parallel>], iteration_bounds = array<i64: 2>, scalar_prefetch = 0 : i64, scratch_operands = 0 : i64, tpu.core_type = #tpu.core_type<tc>, window_params = [{transform_indices = @transform_0, window_bounds = array<i64: 8, 8>}, {transform_indices = @transform_1, window_bounds = array<i64: 1, 2, 8, 8>}, {transform_indices = @transform_2, window_bounds = array<i64: 8, 2>}, {pipeline_mode = #tpu.pipeline_mode<synchronous>, transform_indices = @transform_3, window_bounds = array<i64: 8, 32>}, {pipeline_mode = #tpu.pipeline_mode<synchronous>, transform_indices = @transform_4, window_bounds = array<i64: 8, 32>}, {pipeline_mode = #tpu.pipeline_mode<synchronous>, transform_indices = @transform_5, window_bounds = array<i64: 1, 32>}, {pipeline_mode = #tpu.pipeline_mode<synchronous>, transform_indices = @transform_6, window_bounds = array<i64: 32, 32>}, {pipeline_mode = #tpu.pipeline_mode<synchronous>, transform_indices = @transform_7, window_bounds = array<i64: 1, 32>}, {pipeline_mode = #tpu.pipeline_mode<synchronous>, transform_indices = @transform_8, window_bounds = array<i64: 32, 32>}, {pipeline_mode = #tpu.pipeline_mode<synchronous>, transform_indices = @transform_9, window_bounds = array<i64: 32, 32>}, {pipeline_mode = #tpu.pipeline_mode<synchronous>, transform_indices = @transform_10, window_bounds = array<i64: 1, 32>}, {pipeline_mode = #tpu.pipeline_mode<synchronous>, transform_indices = @transform_11, window_bounds = array<i64: 32, 32>}, {pipeline_mode = #tpu.pipeline_mode<synchronous>, transform_indices = @transform_12, window_bounds = array<i64: 1, 32>}, {pipeline_mode = #tpu.pipeline_mode<synchronous>, transform_indices = @transform_13, window_bounds = array<i64: 64, 32>}, {pipeline_mode = #tpu.pipeline_mode<synchronous>, transform_indices = @transform_14, window_bounds = array<i64: 1, 32>}, {pipeline_mode = #tpu.pipeline_mode<synchronous>, transform_indices = @transform_15, window_bounds = array<i64: 32, 8>}, {pipeline_mode = #tpu.pipeline_mode<synchronous>, transform_indices = @transform_16, window_bounds = array<i64: 1, 8>}, {pipeline_mode = #tpu.pipeline_mode<synchronous>, transform_indices = @transform_17, window_bounds = array<i64: 8, 4>}, {pipeline_mode = #tpu.pipeline_mode<synchronous>, transform_indices = @transform_18, window_bounds = array<i64: 1, 4>}, {pipeline_mode = #tpu.pipeline_mode<synchronous>, transform_indices = @transform_19, window_bounds = array<i64: 4, 1>}, {pipeline_mode = #tpu.pipeline_mode<synchronous>, transform_indices = @transform_20, window_bounds = array<i64: 1, 1>}, {transform_indices = @transform_21, window_bounds = array<i64: 1, 1, 1>}]} {
    %c0 = arith.constant 0 : index
    %c0_0 = arith.constant 0 : index
    %0 = vector.load %arg1[%c0, %c0_0] : memref<8x8xf32, #tpu.memory_space<vmem>>, vector<8x8xf32>
    %c0_1 = arith.constant 0 : index
    %c0_2 = arith.constant 0 : index
    %1 = vector.load %arg7[%c0_1, %c0_2] : memref<32x32xf32, #tpu.memory_space<vmem>>, vector<32x32xf32>
    %c0_3 = arith.constant 0 : index
    %c0_4 = arith.constant 0 : index
    %2 = vector.load %arg8[%c0_3, %c0_4] : memref<1x32xf32, #tpu.memory_space<vmem>>, vector<1x32xf32>
    %c0_5 = arith.constant 0 : index
    %c0_6 = arith.constant 0 : index
    %3 = vector.load %arg4[%c0_5, %c0_6] : memref<8x32xf32, #tpu.memory_space<vmem>>, vector<8x32xf32>
    %cst = arith.constant dense<0.000000e+00> : vector<8x32xf32>
    %4 = tpu.matmul %0, %3, %cst {dimension_numbers = #tpu.dot_dimension_numbers<[1], [0], [0], [1], [0, 0, 1, 1], [], []>} : vector<8x8xf32>, vector<8x32xf32>, vector<8x32xf32> -> vector<8x32xf32>
    %c0_7 = arith.constant 0 : index
    %c0_8 = arith.constant 0 : index
    %5 = vector.load %arg6[%c0_7, %c0_8] : memref<1x32xf32, #tpu.memory_space<vmem>>, vector<1x32xf32>
    %6 = vector.broadcast %5 : vector<1x32xf32> to vector<8x32xf32>
    %7 = arith.addf %4, %6 : vector<8x32xf32>
    %c0_9 = arith.constant 0 : index
    %c0_10 = arith.constant 0 : index
    %8 = vector.load %arg5[%c0_9, %c0_10] : memref<8x32xf32, #tpu.memory_space<vmem>>, vector<8x32xf32>
    %cst_11 = arith.constant dense<0.000000e+00> : vector<8x32xf32>
    %9 = tpu.matmul %0, %8, %cst_11 {dimension_numbers = #tpu.dot_dimension_numbers<[1], [0], [0], [1], [0, 0, 1, 1], [], []>} : vector<8x8xf32>, vector<8x32xf32>, vector<8x32xf32> -> vector<8x32xf32>
    %c0_12 = arith.constant 0 : index
    %c0_13 = arith.constant 0 : index
    %c0_14 = arith.constant 0 : index
    %c0_15 = arith.constant 0 : index
    %10 = vector.load %arg2[%c0_12, %c0_13, %c0_14, %c0_15] : memref<1x2x8x8xf32, #tpu.memory_space<vmem>>, vector<1x1x8x8xf32>
    %11 = vector.shape_cast %10 : vector<1x1x8x8xf32> to vector<8x8xf32>
    %cst_16 = arith.constant dense<0.000000e+00> : vector<8x32xf32>
    %12 = tpu.matmul %11, %9, %cst_16 {dimension_numbers = #tpu.dot_dimension_numbers<[1], [0], [0], [1], [0, 0, 1, 1], [], []>} : vector<8x8xf32>, vector<8x32xf32>, vector<8x32xf32> -> vector<8x32xf32>
    %13 = arith.addf %7, %12 : vector<8x32xf32>
    %cst_17 = arith.constant 0.000000e+00 : f32
    %14 = vector.broadcast %cst_17 : f32 to vector<8x32xf32>
    %15 = arith.maximumf %13, %14 : vector<8x32xf32>
    %cst_18 = arith.constant dense<0.000000e+00> : vector<8x32xf32>
    %16 = tpu.matmul %15, %1, %cst_18 {dimension_numbers = #tpu.dot_dimension_numbers<[1], [0], [0], [1], [0, 0, 1, 1], [], []>} : vector<8x32xf32>, vector<32x32xf32>, vector<8x32xf32> -> vector<8x32xf32>
    %17 = vector.broadcast %2 : vector<1x32xf32> to vector<8x32xf32>
    %18 = arith.addf %16, %17 : vector<8x32xf32>
    %cst_19 = arith.constant 0.000000e+00 : f32
    %19 = vector.broadcast %cst_19 : f32 to vector<8x32xf32>
    %20 = arith.maximumf %18, %19 : vector<8x32xf32>
    %c0_20 = arith.constant 0 : index
    %c0_21 = arith.constant 0 : index
    %21 = vector.load %arg3[%c0_20, %c0_21] : memref<8x2xf32, #tpu.memory_space<vmem>>, vector<8x1xf32>
    %22 = vector.broadcast %21 : vector<8x1xf32> to vector<8x32xf32>
    %23 = arith.addf %20, %22 : vector<8x32xf32>
    %c0_22 = arith.constant 0 : index
    %c1 = arith.constant 1 : index
    %c0_23 = arith.constant 0 : index
    %c0_24 = arith.constant 0 : index
    %24 = vector.load %arg2[%c0_22, %c1, %c0_23, %c0_24] : memref<1x2x8x8xf32, #tpu.memory_space<vmem>>, vector<1x1x8x8xf32>
    %25 = vector.shape_cast %24 : vector<1x1x8x8xf32> to vector<8x8xf32>
    %cst_25 = arith.constant dense<0.000000e+00> : vector<8x32xf32>
    %26 = tpu.matmul %25, %9, %cst_25 {dimension_numbers = #tpu.dot_dimension_numbers<[1], [0], [0], [1], [0, 0, 1, 1], [], []>} : vector<8x8xf32>, vector<8x32xf32>, vector<8x32xf32> -> vector<8x32xf32>
    %27 = arith.addf %7, %26 : vector<8x32xf32>
    %cst_26 = arith.constant 0.000000e+00 : f32
    %28 = vector.broadcast %cst_26 : f32 to vector<8x32xf32>
    %29 = arith.maximumf %27, %28 : vector<8x32xf32>
    %cst_27 = arith.constant dense<0.000000e+00> : vector<8x32xf32>
    %30 = tpu.matmul %29, %1, %cst_27 {dimension_numbers = #tpu.dot_dimension_numbers<[1], [0], [0], [1], [0, 0, 1, 1], [], []>} : vector<8x32xf32>, vector<32x32xf32>, vector<8x32xf32> -> vector<8x32xf32>
    %31 = vector.broadcast %2 : vector<1x32xf32> to vector<8x32xf32>
    %32 = arith.addf %30, %31 : vector<8x32xf32>
    %cst_28 = arith.constant 0.000000e+00 : f32
    %33 = vector.broadcast %cst_28 : f32 to vector<8x32xf32>
    %34 = arith.maximumf %32, %33 : vector<8x32xf32>
    %c0_29 = arith.constant 0 : index
    %c1_30 = arith.constant 1 : index
    %35 = vector.load %arg3[%c0_29, %c1_30] : memref<8x2xf32, #tpu.memory_space<vmem>>, vector<8x1xf32>
    %36 = vector.broadcast %35 : vector<8x1xf32> to vector<8x32xf32>
    %37 = arith.addf %34, %36 : vector<8x32xf32>
    %38 = arith.maximumf %23, %37 : vector<8x32xf32>
    %c0_31 = arith.constant 0 : index
    %c0_32 = arith.constant 0 : index
    %39 = vector.load %arg12[%c0_31, %c0_32] : memref<32x32xf32, #tpu.memory_space<vmem>>, vector<32x32xf32>
    %c0_33 = arith.constant 0 : index
    %c0_34 = arith.constant 0 : index
    %40 = vector.load %arg13[%c0_33, %c0_34] : memref<1x32xf32, #tpu.memory_space<vmem>>, vector<1x32xf32>
    %c0_35 = arith.constant 0 : index
    %c0_36 = arith.constant 0 : index
    %41 = vector.load %arg9[%c0_35, %c0_36] : memref<32x32xf32, #tpu.memory_space<vmem>>, vector<32x32xf32>
    %cst_37 = arith.constant dense<0.000000e+00> : vector<8x32xf32>
    %42 = tpu.matmul %38, %41, %cst_37 {dimension_numbers = #tpu.dot_dimension_numbers<[1], [0], [0], [1], [0, 0, 1, 1], [], []>} : vector<8x32xf32>, vector<32x32xf32>, vector<8x32xf32> -> vector<8x32xf32>
    %c0_38 = arith.constant 0 : index
    %c0_39 = arith.constant 0 : index
    %43 = vector.load %arg11[%c0_38, %c0_39] : memref<1x32xf32, #tpu.memory_space<vmem>>, vector<1x32xf32>
    %44 = vector.broadcast %43 : vector<1x32xf32> to vector<8x32xf32>
    %45 = arith.addf %42, %44 : vector<8x32xf32>
    %c0_40 = arith.constant 0 : index
    %c0_41 = arith.constant 0 : index
    %46 = vector.load %arg10[%c0_40, %c0_41] : memref<32x32xf32, #tpu.memory_space<vmem>>, vector<32x32xf32>
    %cst_42 = arith.constant dense<0.000000e+00> : vector<8x32xf32>
    %47 = tpu.matmul %38, %46, %cst_42 {dimension_numbers = #tpu.dot_dimension_numbers<[1], [0], [0], [1], [0, 0, 1, 1], [], []>} : vector<8x32xf32>, vector<32x32xf32>, vector<8x32xf32> -> vector<8x32xf32>
    %c0_43 = arith.constant 0 : index
    %c0_44 = arith.constant 0 : index
    %c0_45 = arith.constant 0 : index
    %c0_46 = arith.constant 0 : index
    %48 = vector.load %arg2[%c0_43, %c0_44, %c0_45, %c0_46] : memref<1x2x8x8xf32, #tpu.memory_space<vmem>>, vector<1x1x8x8xf32>
    %49 = vector.shape_cast %48 : vector<1x1x8x8xf32> to vector<8x8xf32>
    %cst_47 = arith.constant dense<0.000000e+00> : vector<8x32xf32>
    %50 = tpu.matmul %49, %47, %cst_47 {dimension_numbers = #tpu.dot_dimension_numbers<[1], [0], [0], [1], [0, 0, 1, 1], [], []>} : vector<8x8xf32>, vector<8x32xf32>, vector<8x32xf32> -> vector<8x32xf32>
    %51 = arith.addf %45, %50 : vector<8x32xf32>
    %cst_48 = arith.constant 0.000000e+00 : f32
    %52 = vector.broadcast %cst_48 : f32 to vector<8x32xf32>
    %53 = arith.maximumf %51, %52 : vector<8x32xf32>
    %cst_49 = arith.constant dense<0.000000e+00> : vector<8x32xf32>
    %54 = tpu.matmul %53, %39, %cst_49 {dimension_numbers = #tpu.dot_dimension_numbers<[1], [0], [0], [1], [0, 0, 1, 1], [], []>} : vector<8x32xf32>, vector<32x32xf32>, vector<8x32xf32> -> vector<8x32xf32>
    %55 = vector.broadcast %40 : vector<1x32xf32> to vector<8x32xf32>
    %56 = arith.addf %54, %55 : vector<8x32xf32>
    %cst_50 = arith.constant 0.000000e+00 : f32
    %57 = vector.broadcast %cst_50 : f32 to vector<8x32xf32>
    %58 = arith.maximumf %56, %57 : vector<8x32xf32>
    %c0_51 = arith.constant 0 : index
    %c0_52 = arith.constant 0 : index
    %59 = vector.load %arg3[%c0_51, %c0_52] : memref<8x2xf32, #tpu.memory_space<vmem>>, vector<8x1xf32>
    %60 = vector.broadcast %59 : vector<8x1xf32> to vector<8x32xf32>
    %61 = arith.addf %58, %60 : vector<8x32xf32>
    %c0_53 = arith.constant 0 : index
    %c1_54 = arith.constant 1 : index
    %c0_55 = arith.constant 0 : index
    %c0_56 = arith.constant 0 : index
    %62 = vector.load %arg2[%c0_53, %c1_54, %c0_55, %c0_56] : memref<1x2x8x8xf32, #tpu.memory_space<vmem>>, vector<1x1x8x8xf32>
    %63 = vector.shape_cast %62 : vector<1x1x8x8xf32> to vector<8x8xf32>
    %cst_57 = arith.constant dense<0.000000e+00> : vector<8x32xf32>
    %64 = tpu.matmul %63, %47, %cst_57 {dimension_numbers = #tpu.dot_dimension_numbers<[1], [0], [0], [1], [0, 0, 1, 1], [], []>} : vector<8x8xf32>, vector<8x32xf32>, vector<8x32xf32> -> vector<8x32xf32>
    %65 = arith.addf %45, %64 : vector<8x32xf32>
    %cst_58 = arith.constant 0.000000e+00 : f32
    %66 = vector.broadcast %cst_58 : f32 to vector<8x32xf32>
    %67 = arith.maximumf %65, %66 : vector<8x32xf32>
    %cst_59 = arith.constant dense<0.000000e+00> : vector<8x32xf32>
    %68 = tpu.matmul %67, %39, %cst_59 {dimension_numbers = #tpu.dot_dimension_numbers<[1], [0], [0], [1], [0, 0, 1, 1], [], []>} : vector<8x32xf32>, vector<32x32xf32>, vector<8x32xf32> -> vector<8x32xf32>
    %69 = vector.broadcast %40 : vector<1x32xf32> to vector<8x32xf32>
    %70 = arith.addf %68, %69 : vector<8x32xf32>
    %cst_60 = arith.constant 0.000000e+00 : f32
    %71 = vector.broadcast %cst_60 : f32 to vector<8x32xf32>
    %72 = arith.maximumf %70, %71 : vector<8x32xf32>
    %c0_61 = arith.constant 0 : index
    %c1_62 = arith.constant 1 : index
    %73 = vector.load %arg3[%c0_61, %c1_62] : memref<8x2xf32, #tpu.memory_space<vmem>>, vector<8x1xf32>
    %74 = vector.broadcast %73 : vector<8x1xf32> to vector<8x32xf32>
    %75 = arith.addf %72, %74 : vector<8x32xf32>
    %76 = arith.maximumf %61, %75 : vector<8x32xf32>
    %77 = tpu.concatenate %38, %76 in 1 : vector<8x32xf32>, vector<8x32xf32> -> vector<8x64xf32>
    %c0_63 = arith.constant 0 : index
    %c0_64 = arith.constant 0 : index
    %78 = vector.load %arg14[%c0_63, %c0_64] : memref<64x32xf32, #tpu.memory_space<vmem>>, vector<64x32xf32>
    %cst_65 = arith.constant dense<0.000000e+00> : vector<8x32xf32>
    %79 = tpu.matmul %77, %78, %cst_65 {dimension_numbers = #tpu.dot_dimension_numbers<[1], [0], [0], [1], [0, 0, 1, 1], [], []>} : vector<8x64xf32>, vector<64x32xf32>, vector<8x32xf32> -> vector<8x32xf32>
    %c0_66 = arith.constant 0 : index
    %c0_67 = arith.constant 0 : index
    %80 = vector.load %arg15[%c0_66, %c0_67] : memref<1x32xf32, #tpu.memory_space<vmem>>, vector<1x32xf32>
    %81 = vector.broadcast %80 : vector<1x32xf32> to vector<8x32xf32>
    %82 = arith.addf %79, %81 : vector<8x32xf32>
    %cst_68 = arith.constant 0.000000e+00 : f32
    %83 = vector.broadcast %cst_68 : f32 to vector<8x32xf32>
    %84 = arith.maximumf %82, %83 : vector<8x32xf32>
    %cst_69 = arith.constant dense<0.000000e+00> : vector<32xf32>
    %85 = vector.multi_reduction <add>, %84, %cst_69 [0] : vector<8x32xf32> to vector<32xf32>
    %86 = vector.shape_cast %85 : vector<32xf32> to vector<1x32xf32>
    %cst_70 = arith.constant 1.250000e-01 : f32
    %87 = vector.broadcast %cst_70 : f32 to vector<1x32xf32>
    %88 = arith.mulf %86, %87 : vector<1x32xf32>
    %c0_71 = arith.constant 0 : index
    %c0_72 = arith.constant 0 : index
    %89 = vector.load %arg16[%c0_71, %c0_72] : memref<32x8xf32, #tpu.memory_space<vmem>>, vector<32x8xf32>
    %cst_73 = arith.constant dense<0.000000e+00> : vector<1x8xf32>
    %90 = tpu.matmul %88, %89, %cst_73 {dimension_numbers = #tpu.dot_dimension_numbers<[1], [0], [0], [1], [0, 0, 1, 1], [], []>} : vector<1x32xf32>, vector<32x8xf32>, vector<1x8xf32> -> vector<1x8xf32>
    %c0_74 = arith.constant 0 : index
    %c0_75 = arith.constant 0 : index
    %91 = vector.load %arg17[%c0_74, %c0_75] : memref<1x8xf32, #tpu.memory_space<vmem>>, vector<1x8xf32>
    %92 = arith.addf %90, %91 : vector<1x8xf32>
    %cst_76 = arith.constant 0.000000e+00 : f32
    %93 = vector.broadcast %cst_76 : f32 to vector<1x8xf32>
    %94 = arith.maximumf %92, %93 : vector<1x8xf32>
    %c0_77 = arith.constant 0 : index
    %c0_78 = arith.constant 0 : index
    %95 = vector.load %arg18[%c0_77, %c0_78] : memref<8x4xf32, #tpu.memory_space<vmem>>, vector<8x4xf32>
    %cst_79 = arith.constant dense<0.000000e+00> : vector<1x4xf32>
    %96 = tpu.matmul %94, %95, %cst_79 {dimension_numbers = #tpu.dot_dimension_numbers<[1], [0], [0], [1], [0, 0, 1, 1], [], []>} : vector<1x8xf32>, vector<8x4xf32>, vector<1x4xf32> -> vector<1x4xf32>
    %c0_80 = arith.constant 0 : index
    %c0_81 = arith.constant 0 : index
    %97 = vector.load %arg19[%c0_80, %c0_81] : memref<1x4xf32, #tpu.memory_space<vmem>>, vector<1x4xf32>
    %98 = arith.addf %96, %97 : vector<1x4xf32>
    %cst_82 = arith.constant 0.000000e+00 : f32
    %99 = vector.broadcast %cst_82 : f32 to vector<1x4xf32>
    %100 = arith.maximumf %98, %99 : vector<1x4xf32>
    %c0_83 = arith.constant 0 : index
    %c0_84 = arith.constant 0 : index
    %101 = vector.load %arg20[%c0_83, %c0_84] : memref<4x1xf32, #tpu.memory_space<vmem>>, vector<4x1xf32>
    %cst_85 = arith.constant dense<0.000000e+00> : vector<1x1xf32>
    %102 = tpu.matmul %100, %101, %cst_85 {dimension_numbers = #tpu.dot_dimension_numbers<[1], [0], [0], [1], [0, 0, 1, 1], [], []>} : vector<1x4xf32>, vector<4x1xf32>, vector<1x1xf32> -> vector<1x1xf32>
    %c0_86 = arith.constant 0 : index
    %c0_87 = arith.constant 0 : index
    %103 = vector.load %arg21[%c0_86, %c0_87] : memref<1x1xf32, #tpu.memory_space<vmem>>, vector<1x1xf32>
    %104 = arith.addf %102, %103 : vector<1x1xf32>
    %c0_88 = arith.constant 0 : index
    %c0_89 = arith.constant 0 : index
    %c0_90 = arith.constant 0 : index
    %105 = vector.load %arg22[%c0_88, %c0_89, %c0_90] : memref<1x1x1xf32, #tpu.memory_space<vmem>>, vector<1x1x1xf32>
    %106 = vector.shape_cast %105 : vector<1x1x1xf32> to vector<1x1xf32>
    %107 = vector.shape_cast %104 : vector<1x1xf32> to vector<1x1x1xf32>
    tpu.vector_store %arg22[%c0_88, %c0_89, %c0_90], %107 {strides = array<i32>} : memref<1x1x1xf32, #tpu.memory_space<vmem>>, vector<1x1x1xf32>,
    return
  }
  func.func @transform_0(%arg0: i32) -> (i32, i32) {
    %c0_i32 = arith.constant 0 : i32
    %c0_i32_0 = arith.constant 0 : i32
    return %arg0, %c0_i32 : i32, i32
  }
  func.func @transform_1(%arg0: i32) -> (i32, i32, i32, i32) {
    %c0_i32 = arith.constant 0 : i32
    %c0_i32_0 = arith.constant 0 : i32
    %c0_i32_1 = arith.constant 0 : i32
    %c0_i32_2 = arith.constant 0 : i32
    return %arg0, %c0_i32, %c0_i32_0, %c0_i32_1 : i32, i32, i32, i32
  }
  func.func @transform_2(%arg0: i32) -> (i32, i32) {
    %c0_i32 = arith.constant 0 : i32
    %c0_i32_0 = arith.constant 0 : i32
    return %arg0, %c0_i32 : i32, i32
  }
  func.func @transform_3(%arg0: i32) -> (i32, i32) {
    %c0_i32 = arith.constant 0 : i32
    %c0_i32_0 = arith.constant 0 : i32
    %c0_i32_1 = arith.constant 0 : i32
    return %c0_i32, %c0_i32_0 : i32, i32
  }
  func.func @transform_4(%arg0: i32) -> (i32, i32) {
    %c0_i32 = arith.constant 0 : i32
    %c0_i32_0 = arith.constant 0 : i32
    %c0_i32_1 = arith.constant 0 : i32
    return %c0_i32, %c0_i32_0 : i32, i32
  }
  func.func @transform_5(%arg0: i32) -> (i32, i32) {
    %c0_i32 = arith.constant 0 : i32
    %c0_i32_0 = arith.constant 0 : i32
    %c0_i32_1 = arith.constant 0 : i32
    return %c0_i32, %c0_i32_0 : i32, i32
  }
  func.func @transform_6(%arg0: i32) -> (i32, i32) {
    %c0_i32 = arith.constant 0 : i32
    %c0_i32_0 = arith.constant 0 : i32
    %c0_i32_1 = arith.constant 0 : i32
    return %c0_i32, %c0_i32_0 : i32, i32
  }
  func.func @transform_7(%arg0: i32) -> (i32, i32) {
    %c0_i32 = arith.constant 0 : i32
    %c0_i32_0 = arith.constant 0 : i32
    %c0_i32_1 = arith.constant 0 : i32
    return %c0_i32, %c0_i32_0 : i32, i32
  }
  func.func @transform_8(%arg0: i32) -> (i32, i32) {
    %c0_i32 = arith.constant 0 : i32
    %c0_i32_0 = arith.constant 0 : i32
    %c0_i32_1 = arith.constant 0 : i32
    return %c0_i32, %c0_i32_0 : i32, i32
  }
  func.func @transform_9(%arg0: i32) -> (i32, i32) {
    %c0_i32 = arith.constant 0 : i32
    %c0_i32_0 = arith.constant 0 : i32
    %c0_i32_1 = arith.constant 0 : i32
    return %c0_i32, %c0_i32_0 : i32, i32
  }
  func.func @transform_10(%arg0: i32) -> (i32, i32) {
    %c0_i32 = arith.constant 0 : i32
    %c0_i32_0 = arith.constant 0 : i32
    %c0_i32_1 = arith.constant 0 : i32
    return %c0_i32, %c0_i32_0 : i32, i32
  }
  func.func @transform_11(%arg0: i32) -> (i32, i32) {
    %c0_i32 = arith.constant 0 : i32
    %c0_i32_0 = arith.constant 0 : i32
    %c0_i32_1 = arith.constant 0 : i32
    return %c0_i32, %c0_i32_0 : i32, i32
  }
  func.func @transform_12(%arg0: i32) -> (i32, i32) {
    %c0_i32 = arith.constant 0 : i32
    %c0_i32_0 = arith.constant 0 : i32
    %c0_i32_1 = arith.constant 0 : i32
    return %c0_i32, %c0_i32_0 : i32, i32
  }
  func.func @transform_13(%arg0: i32) -> (i32, i32) {
    %c0_i32 = arith.constant 0 : i32
    %c0_i32_0 = arith.constant 0 : i32
    %c0_i32_1 = arith.constant 0 : i32
    return %c0_i32, %c0_i32_0 : i32, i32
  }
  func.func @transform_14(%arg0: i32) -> (i32, i32) {
    %c0_i32 = arith.constant 0 : i32
    %c0_i32_0 = arith.constant 0 : i32
    %c0_i32_1 = arith.constant 0 : i32
    return %c0_i32, %c0_i32_0 : i32, i32
  }
  func.func @transform_15(%arg0: i32) -> (i32, i32) {
    %c0_i32 = arith.constant 0 : i32
    %c0_i32_0 = arith.constant 0 : i32
    %c0_i32_1 = arith.constant 0 : i32
    return %c0_i32, %c0_i32_0 : i32, i32
  }
  func.func @transform_16(%arg0: i32) -> (i32, i32) {
    %c0_i32 = arith.constant 0 : i32
    %c0_i32_0 = arith.constant 0 : i32
    %c0_i32_1 = arith.constant 0 : i32
    return %c0_i32, %c0_i32_0 : i32, i32
  }
  func.func @transform_17(%arg0: i32) -> (i32, i32) {
    %c0_i32 = arith.constant 0 : i32
    %c0_i32_0 = arith.constant 0 : i32
    %c0_i32_1 = arith.constant 0 : i32
    return %c0_i32, %c0_i32_0 : i32, i32
  }
  func.func @transform_18(%arg0: i32) -> (i32, i32) {
    %c0_i32 = arith.constant 0 : i32
    %c0_i32_0 = arith.constant 0 : i32
    %c0_i32_1 = arith.constant 0 : i32
    return %c0_i32, %c0_i32_0 : i32, i32
  }
  func.func @transform_19(%arg0: i32) -> (i32, i32) {
    %c0_i32 = arith.constant 0 : i32
    %c0_i32_0 = arith.constant 0 : i32
    %c0_i32_1 = arith.constant 0 : i32
    return %c0_i32, %c0_i32_0 : i32, i32
  }
  func.func @transform_20(%arg0: i32) -> (i32, i32) {
    %c0_i32 = arith.constant 0 : i32
    %c0_i32_0 = arith.constant 0 : i32
    %c0_i32_1 = arith.constant 0 : i32
    return %c0_i32, %c0_i32_0 : i32, i32
  }
  func.func @transform_21(%arg0: i32) -> (i32, i32, i32) {
    %c0_i32 = arith.constant 0 : i32
    %c0_i32_0 = arith.constant 0 : i32
    %c0_i32_1 = arith.constant 0 : i32
    return %arg0, %c0_i32, %c0_i32_0 : i32, i32, i32
  }
}

</mosaic_0001>

<llo_original>
// kernel: tpu_custom_call.1
$region0: #{tpu_custom_call.1}
  #allocation0 [shape = 'u32[]', space=smem, size = 0x4, offset = 0x4, fixed_abs, tag = 'smem constant byte address 0x4 - core index']
  #allocation1 [shape = 'u32[72,128]{1,0:T(1,128)}', space=vmem, size = 0x9000, scoped, tag = 'internal scratch']
  #allocation2 [shape = 'f32[1,1]{1,0:T(1,128)S(1)}', space=vmem, size = 0x200, scoped, tag = 'scoped memory for tpu_custom_call.1']
  %s0 = inlined_call_operand.vmem [shape: f32[16,8], index: 0, kind: input, shape index: {}]
  %s1 = inlined_call_operand.vmem [shape: f32[2,2,8,8], index: 1, kind: input, shape index: {}]
  %s2 = inlined_call_operand.vmem [shape: f32[16,2], index: 2, kind: input, shape index: {}]
  %s3 = inlined_call_operand.vmem [shape: f32[8,32], index: 3, kind: input, shape index: {}]
  %s4 = inlined_call_operand.hbm [shape: f32[8,32], index: 4, kind: input, shape index: {}]
  %s5 = inlined_call_operand.vmem [shape: f32[1,32], index: 5, kind: input, shape index: {}]
  %s6 = inlined_call_operand.vmem [shape: f32[32,32], index: 6, kind: input, shape index: {}]
  %s7 = inlined_call_operand.vmem [shape: f32[1,32], index: 7, kind: input, shape index: {}]
  %s8 = inlined_call_operand.vmem [shape: f32[32,32], index: 8, kind: input, shape index: {}]
  %s9 = inlined_call_operand.vmem [shape: f32[32,32], index: 9, kind: input, shape index: {}]
  %s10 = inlined_call_operand.vmem [shape: f32[1,32], index: 10, kind: input, shape index: {}]
  %s11 = inlined_call_operand.hbm [shape: f32[32,32], index: 11, kind: input, shape index: {}]
  %s12 = inlined_call_operand.vmem [shape: f32[1,32], index: 12, kind: input, shape index: {}]
  %s13 = inlined_call_operand.vmem [shape: f32[64,32], index: 13, kind: input, shape index: {}]
  %s14 = inlined_call_operand.vmem [shape: f32[1,32], index: 14, kind: input, shape index: {}]
  %s15 = inlined_call_operand.vmem [shape: f32[32,8], index: 15, kind: input, shape index: {}]
  %s16 = inlined_call_operand.vmem [shape: f32[1,8], index: 16, kind: input, shape index: {}]
  %s17 = inlined_call_operand.vmem [shape: f32[8,4], index: 17, kind: input, shape index: {}]
  %s18 = inlined_call_operand.vmem [shape: f32[1,4], index: 18, kind: input, shape index: {}]
  %s19 = inlined_call_operand.vmem [shape: f32[4,1], index: 19, kind: input, shape index: {}]
  %s20 = inlined_call_operand.<no memory space> [shape: f32[1,1], index: 20, kind: input, shape index: {}]
  %s21 = inlined_call_operand.vmem [shape: f32[2,1,1], index: 21, kind: output, shape index: {}]
  %s22 = sld [smem:[#allocation0]]
  $region125: #{tpu_custom_call.1} parent=0
    _
  %s24 = ssub.s32 1, %s22
  %s25 = scalar_select 0, %s24, %s22
  %v26 = vstv %s20
  %27 = vst [vmem:[#allocation2] sm:$0x1] %v26
  $region1: #{tpu_custom_call.1} parent=0
    #allocation3 [shape = 'u8[4096]{0}', space=vmem, size = 0x1000, scoped, tag = 'input window, operand 4, single buffered']
    #allocation4 [shape = 's32[2]{0}', space=sflag, size = 0x8, scoped, tag = 'scoped memory for tpu_custom_call.1']
    #allocation5 [shape = 'u8[16384]{0}', space=vmem, size = 0x4000, scoped, tag = 'input window, operand 11, single buffered']
    #allocation6 [shape = 's32[1]{0}', space=sflag, size = 0x4, scoped, tag = 'scoped memory for tpu_custom_call.1']
    %28 = vsyncpa [#allocation4], 0
    %29 = vsyncpa [#allocation6], 0
    loop: start=0, step=1, limit=4
    $region2: #{tpu_custom_call.1} parent=1 // loop_pre_header
      _
    $region3: #{tpu_custom_call.1} parent=1 // loop_header
      %s31 = sphi 0, %s35
      %p32 = scmp.ge.s32.totalorder %s31, 4
      %s41 = sphi 0, %s43
      %s44 = sphi 0, %s41
      %s45 = sphi 0, %s44
      %s61 = sphi 0, %s45
      %s67 = sphi 0, %s69
      %s70 = sphi 0, %s67
      %s71 = sphi 0, %s70
      %s87 = sphi 0, %s71
      %s93 = sphi 0, %s95
      %s96 = sphi 0, %s93
      %s97 = sphi 0, %s96
      %s113 = sphi 0, %s97
      %s117 = sphi 0, %s117
      %s119 = sphi 0, %s117
      %s120 = sphi 0, %s119
      %s134 = sphi 0, %s120
      %s138 = sphi 0, %s138
      %s140 = sphi 0, %s138
      %s141 = sphi 0, %s140
      %s155 = sphi 0, %s141
      %s159 = sphi 0, %s159
      %s161 = sphi 0, %s159
      %s162 = sphi 0, %s161
      %s176 = sphi 0, %s162
      %s180 = sphi 0, %s180
      %s182 = sphi 0, %s180
      %s183 = sphi 0, %s182
      %s197 = sphi 0, %s183
      %s201 = sphi 0, %s201
      %s203 = sphi 0, %s201
      %s204 = sphi 0, %s203
      %s218 = sphi 0, %s204
      %s222 = sphi 0, %s222
      %s224 = sphi 0, %s222
      %s225 = sphi 0, %s224
      %s239 = sphi 0, %s225
      %s243 = sphi 0, %s243
      %s245 = sphi 0, %s243
      %s246 = sphi 0, %s245
      %s260 = sphi 0, %s246
      %s264 = sphi 0, %s264
      %s266 = sphi 0, %s264
      %s267 = sphi 0, %s266
      %s281 = sphi 0, %s267
      %s285 = sphi 0, %s285
      %s287 = sphi 0, %s285
      %s288 = sphi 0, %s287
      %s302 = sphi 0, %s288
      %s306 = sphi 0, %s306
      %s308 = sphi 0, %s306
      %s309 = sphi 0, %s308
      %s323 = sphi 0, %s309
      %s327 = sphi 0, %s327
      %s329 = sphi 0, %s327
      %s330 = sphi 0, %s329
      %s344 = sphi 0, %s330
      %s348 = sphi 0, %s348
      %s350 = sphi 0, %s348
      %s351 = sphi 0, %s350
      %s365 = sphi 0, %s351
      %s369 = sphi 0, %s369
      %s371 = sphi 0, %s369
      %s372 = sphi 0, %s371
      %s386 = sphi 0, %s372
      %s390 = sphi 0, %s390
      %s392 = sphi 0, %s390
      %s393 = sphi 0, %s392
      %s407 = sphi 0, %s393
      %s411 = sphi 0, %s411
      %s413 = sphi 0, %s411
      %s414 = sphi 0, %s413
      %s428 = sphi 0, %s414
      %s432 = sphi 0, %s432
      %s434 = sphi 0, %s432
      %s435 = sphi 0, %s434
      %s449 = sphi 0, %s435
      %s453 = sphi 0, %s453
      %s455 = sphi 0, %s453
      %s456 = sphi 0, %s455
      %s470 = sphi 0, %s456
      %s474 = sphi 0, %s474
      %s476 = sphi 0, %s474
      %s477 = sphi 0, %s476
      %s491 = sphi 0, %s477
      %s497 = sphi 0, %s499
      %s500 = sphi 0, %s497
      %s501 = sphi 0, %s500
      %s517 = sphi 0, %s501
    $region4: #{tpu_custom_call.1} parent=1 // loop_header_branch
      %34 = sbr.rel (%p32) target = $region8
    $region5: #{tpu_custom_call.1} parent=1 // loop_body
      %s36 = ssub.s32 %s31, 1
      %s37 = ssub.s32 %s31, 2
      %s38 = sadd.s32 %s31, 1
      %s39 = ssub.s32 %s31, %s38
      %p40 = scmp.eq.s32.totalorder %s39, 0
      %s42 = sadd.s32 %s41, 1
      %s43 = scalar_select %p40, %s41, %s42
      %p46 = pneg %p40
      %p47 = scmp.eq.s32.totalorder %s31, 1
      %p48 = por %p46, %p47
      %p49 = scmp.ne.s32.totalorder %s41, %s44
      %p50 = scmp.eq.s32.totalorder %s31, 0
      %p51 = por %p49, %p50
      %p52 = scmp.ne.s32.totalorder %s41, %s44
      %p53 = scmp.eq.s32.totalorder %s36, 1
      %p54 = por %p52, %p53
      %p55 = scmp.ne.s32.totalorder %s44, %s45
      %p56 = scmp.eq.s32.totalorder %s36, 0
      %p57 = por %p55, %p56
      %p58 = scmp.ne.s32.totalorder %s44, %s45
      %p59 = scmp.eq.s32.totalorder %s37, 1
      %p60 = por %p58, %p59
      %p62 = scmp.ne.s32.totalorder %s45, %s61
      %p63 = scmp.eq.s32.totalorder %s37, 0
      %p64 = por %p62, %p63
      %s65 = ssub.s32 %s31, %s38
      %p66 = scmp.eq.s32.totalorder %s65, 0
      %s68 = sadd.s32 %s67, 1
      %s69 = scalar_select %p66, %s67, %s68
      %p72 = pneg %p66
      %p73 = scmp.eq.s32.totalorder %s31, 1
      %p74 = por %p72, %p73
      %p75 = scmp.ne.s32.totalorder %s67, %s70
      %p76 = scmp.eq.s32.totalorder %s31, 0
      %p77 = por %p75, %p76
      %p78 = scmp.ne.s32.totalorder %s67, %s70
      %p79 = scmp.eq.s32.totalorder %s36, 1
      %p80 = por %p78, %p79
      %p81 = scmp.ne.s32.totalorder %s70, %s71
      %p82 = scmp.eq.s32.totalorder %s36, 0
      %p83 = por %p81, %p82
      %p84 = scmp.ne.s32.totalorder %s70, %s71
      %p85 = scmp.eq.s32.totalorder %s37, 1
      %p86 = por %p84, %p85
      %p88 = scmp.ne.s32.totalorder %s71, %s87
      %p89 = scmp.eq.s32.totalorder %s37, 0
      %p90 = por %p88, %p89
      %s91 = ssub.s32 %s31, %s38
      %p92 = scmp.eq.s32.totalorder %s91, 0
      %s94 = sadd.s32 %s93, 1
      %s95 = scalar_select %p92, %s93, %s94
      %p98 = pneg %p92
      %p99 = scmp.eq.s32.totalorder %s31, 1
      %p100 = por %p98, %p99
      %p101 = scmp.ne.s32.totalorder %s93, %s96
      %p102 = scmp.eq.s32.totalorder %s31, 0
      %p103 = por %p101, %p102
      %p104 = scmp.ne.s32.totalorder %s93, %s96
      %p105 = scmp.eq.s32.totalorder %s36, 1
      %p106 = por %p104, %p105
      %p107 = scmp.ne.s32.totalorder %s96, %s97
      %p108 = scmp.eq.s32.totalorder %s36, 0
      %p109 = por %p107, %p108
      %p110 = scmp.ne.s32.totalorder %s96, %s97
      %p111 = scmp.eq.s32.totalorder %s37, 1
      %p112 = por %p110, %p111
      %p114 = scmp.ne.s32.totalorder %s97, %s113
      %p115 = scmp.eq.s32.totalorder %s37, 0
      %p116 = por %p114, %p115
      %s118 = sadd.s32 %s117, 1
      %p121 = scmp.eq.s32.totalorder %s31, 1
      %p122 = scmp.ne.s32.totalorder %s117, %s119
      %p123 = scmp.eq.s32.totalorder %s31, 0
      %p124 = por %p122, %p123
      %p125 = scmp.ne.s32.totalorder %s117, %s119
      %p126 = scmp.eq.s32.totalorder %s36, 1
      %p127 = por %p125, %p126
      %p128 = scmp.ne.s32.totalorder %s119, %s120
      %p129 = scmp.eq.s32.totalorder %s36, 0
      %p130 = por %p128, %p129
      %p131 = scmp.ne.s32.totalorder %s119, %s120
      %p132 = scmp.eq.s32.totalorder %s37, 1
      %p133 = por %p131, %p132
      %p135 = scmp.ne.s32.totalorder %s120, %s134
      %p136 = scmp.eq.s32.totalorder %s37, 0
      %p137 = por %p135, %p136
      %s139 = sadd.s32 %s138, 1
      %p142 = scmp.eq.s32.totalorder %s31, 1
      %p143 = scmp.ne.s32.totalorder %s138, %s140
      %p144 = scmp.eq.s32.totalorder %s31, 0
      %p145 = por %p143, %p144
      %p146 = scmp.ne.s32.totalorder %s138, %s140
      %p147 = scmp.eq.s32.totalorder %s36, 1
      %p148 = por %p146, %p147
      %p149 = scmp.ne.s32.totalorder %s140, %s141
      %p150 = scmp.eq.s32.totalorder %s36, 0
      %p151 = por %p149, %p150
      %p152 = scmp.ne.s32.totalorder %s140, %s141
      %p153 = scmp.eq.s32.totalorder %s37, 1
      %p154 = por %p152, %p153
      %p156 = scmp.ne.s32.totalorder %s141, %s155
      %p157 = scmp.eq.s32.totalorder %s37, 0
      %p158 = por %p156, %p157
      %s160 = sadd.s32 %s159, 1
      %p163 = scmp.eq.s32.totalorder %s31, 1
      %p164 = scmp.ne.s32.totalorder %s159, %s161
      %p165 = scmp.eq.s32.totalorder %s31, 0
      %p166 = por %p164, %p165
      %p167 = scmp.ne.s32.totalorder %s159, %s161
      %p168 = scmp.eq.s32.totalorder %s36, 1
      %p169 = por %p167, %p168
      %p170 = scmp.ne.s32.totalorder %s161, %s162
      %p171 = scmp.eq.s32.totalorder %s36, 0
      %p172 = por %p170, %p171
      %p173 = scmp.ne.s32.totalorder %s161, %s162
      %p174 = scmp.eq.s32.totalorder %s37, 1
      %p175 = por %p173, %p174
      %p177 = scmp.ne.s32.totalorder %s162, %s176
      %p178 = scmp.eq.s32.totalorder %s37, 0
      %p179 = por %p177, %p178
      %s181 = sadd.s32 %s180, 1
      %p184 = scmp.eq.s32.totalorder %s31, 1
      %p185 = scmp.ne.s32.totalorder %s180, %s182
      %p186 = scmp.eq.s32.totalorder %s31, 0
      %p187 = por %p185, %p186
      %p188 = scmp.ne.s32.totalorder %s180, %s182
      %p189 = scmp.eq.s32.totalorder %s36, 1
      %p190 = por %p188, %p189
      %p191 = scmp.ne.s32.totalorder %s182, %s183
      %p192 = scmp.eq.s32.totalorder %s36, 0
      %p193 = por %p191, %p192
      %p194 = scmp.ne.s32.totalorder %s182, %s183
      %p195 = scmp.eq.s32.totalorder %s37, 1
      %p196 = por %p194, %p195
      %p198 = scmp.ne.s32.totalorder %s183, %s197
      %p199 = scmp.eq.s32.totalorder %s37, 0
      %p200 = por %p198, %p199
      %s202 = sadd.s32 %s201, 1
      %p205 = scmp.eq.s32.totalorder %s31, 1
      %p206 = scmp.ne.s32.totalorder %s201, %s203
      %p207 = scmp.eq.s32.totalorder %s31, 0
      %p208 = por %p206, %p207
      %p209 = scmp.ne.s32.totalorder %s201, %s203
      %p210 = scmp.eq.s32.totalorder %s36, 1
      %p211 = por %p209, %p210
      %p212 = scmp.ne.s32.totalorder %s203, %s204
      %p213 = scmp.eq.s32.totalorder %s36, 0
      %p214 = por %p212, %p213
      %p215 = scmp.ne.s32.totalorder %s203, %s204
      %p216 = scmp.eq.s32.totalorder %s37, 1
      %p217 = por %p215, %p216
      %p219 = scmp.ne.s32.totalorder %s204, %s218
      %p220 = scmp.eq.s32.totalorder %s37, 0
      %p221 = por %p219, %p220
      %s223 = sadd.s32 %s222, 1
      %p226 = scmp.eq.s32.totalorder %s31, 1
      %p227 = scmp.ne.s32.totalorder %s222, %s224
      %p228 = scmp.eq.s32.totalorder %s31, 0
      %p229 = por %p227, %p228
      %p230 = scmp.ne.s32.totalorder %s222, %s224
      %p231 = scmp.eq.s32.totalorder %s36, 1
      %p232 = por %p230, %p231
      %p233 = scmp.ne.s32.totalorder %s224, %s225
      %p234 = scmp.eq.s32.totalorder %s36, 0
      %p235 = por %p233, %p234
      %p236 = scmp.ne.s32.totalorder %s224, %s225
      %p237 = scmp.eq.s32.totalorder %s37, 1
      %p238 = por %p236, %p237
      %p240 = scmp.ne.s32.totalorder %s225, %s239
      %p241 = scmp.eq.s32.totalorder %s37, 0
      %p242 = por %p240, %p241
      %s244 = sadd.s32 %s243, 1
      %p247 = scmp.eq.s32.totalorder %s31, 1
      %p248 = scmp.ne.s32.totalorder %s243, %s245
      %p249 = scmp.eq.s32.totalorder %s31, 0
      %p250 = por %p248, %p249
      %p251 = scmp.ne.s32.totalorder %s243, %s245
      %p252 = scmp.eq.s32.totalorder %s36, 1
      %p253 = por %p251, %p252
      %p254 = scmp.ne.s32.totalorder %s245, %s246
      %p255 = scmp.eq.s32.totalorder %s36, 0
      %p256 = por %p254, %p255
      %p257 = scmp.ne.s32.totalorder %s245, %s246
      %p258 = scmp.eq.s32.totalorder %s37, 1
      %p259 = por %p257, %p258
      %p261 = scmp.ne.s32.totalorder %s246, %s260
      %p262 = scmp.eq.s32.totalorder %s37, 0
      %p263 = por %p261, %p262
      %s265 = sadd.s32 %s264, 1
      %p268 = scmp.eq.s32.totalorder %s31, 1
      %p269 = scmp.ne.s32.totalorder %s264, %s266
      %p270 = scmp.eq.s32.totalorder %s31, 0
      %p271 = por %p269, %p270
      %p272 = scmp.ne.s32.totalorder %s264, %s266
      %p273 = scmp.eq.s32.totalorder %s36, 1
      %p274 = por %p272, %p273
      %p275 = scmp.ne.s32.totalorder %s266, %s267
      %p276 = scmp.eq.s32.totalorder %s36, 0
      %p277 = por %p275, %p276
      %p278 = scmp.ne.s32.totalorder %s266, %s267
      %p279 = scmp.eq.s32.totalorder %s37, 1
      %p280 = por %p278, %p279
      %p282 = scmp.ne.s32.totalorder %s267, %s281
      %p283 = scmp.eq.s32.totalorder %s37, 0
      %p284 = por %p282, %p283
      %s286 = sadd.s32 %s285, 1
      %p289 = scmp.eq.s32.totalorder %s31, 1
      %p290 = scmp.ne.s32.totalorder %s285, %s287
      %p291 = scmp.eq.s32.totalorder %s31, 0
      %p292 = por %p290, %p291
      %p293 = scmp.ne.s32.totalorder %s285, %s287
      %p294 = scmp.eq.s32.totalorder %s36, 1
      %p295 = por %p293, %p294
      %p296 = scmp.ne.s32.totalorder %s287, %s288
      %p297 = scmp.eq.s32.totalorder %s36, 0
      %p298 = por %p296, %p297
      %p299 = scmp.ne.s32.totalorder %s287, %s288
      %p300 = scmp.eq.s32.totalorder %s37, 1
      %p301 = por %p299, %p300
      %p303 = scmp.ne.s32.totalorder %s288, %s302
      %p304 = scmp.eq.s32.totalorder %s37, 0
      %p305 = por %p303, %p304
      %s307 = sadd.s32 %s306, 1
      %p310 = scmp.eq.s32.totalorder %s31, 1
      %p311 = scmp.ne.s32.totalorder %s306, %s308
      %p312 = scmp.eq.s32.totalorder %s31, 0
      %p313 = por %p311, %p312
      %p314 = scmp.ne.s32.totalorder %s306, %s308
      %p315 = scmp.eq.s32.totalorder %s36, 1
      %p316 = por %p314, %p315
      %p317 = scmp.ne.s32.totalorder %s308, %s309
      %p318 = scmp.eq.s32.totalorder %s36, 0
      %p319 = por %p317, %p318
      %p320 = scmp.ne.s32.totalorder %s308, %s309
      %p321 = scmp.eq.s32.totalorder %s37, 1
      %p322 = por %p320, %p321
      %p324 = scmp.ne.s32.totalorder %s309, %s323
      %p325 = scmp.eq.s32.totalorder %s37, 0
      %p326 = por %p324, %p325
      %s328 = sadd.s32 %s327, 1
      %p331 = scmp.eq.s32.totalorder %s31, 1
      %p332 = scmp.ne.s32.totalorder %s327, %s329
      %p333 = scmp.eq.s32.totalorder %s31, 0
      %p334 = por %p332, %p333
      %p335 = scmp.ne.s32.totalorder %s327, %s329
      %p336 = scmp.eq.s32.totalorder %s36, 1
      %p337 = por %p335, %p336
      %p338 = scmp.ne.s32.totalorder %s329, %s330
      %p339 = scmp.eq.s32.totalorder %s36, 0
      %p340 = por %p338, %p339
      %p341 = scmp.ne.s32.totalorder %s329, %s330
      %p342 = scmp.eq.s32.totalorder %s37, 1
      %p343 = por %p341, %p342
      %p345 = scmp.ne.s32.totalorder %s330, %s344
      %p346 = scmp.eq.s32.totalorder %s37, 0
      %p347 = por %p345, %p346
      %s349 = sadd.s32 %s348, 1
      %p352 = scmp.eq.s32.totalorder %s31, 1
      %p353 = scmp.ne.s32.totalorder %s348, %s350
      %p354 = scmp.eq.s32.totalorder %s31, 0
      %p355 = por %p353, %p354
      %p356 = scmp.ne.s32.totalorder %s348, %s350
      %p357 = scmp.eq.s32.totalorder %s36, 1
      %p358 = por %p356, %p357
      %p359 = scmp.ne.s32.totalorder %s350, %s351
      %p360 = scmp.eq.s32.totalorder %s36, 0
      %p361 = por %p359, %p360
      %p362 = scmp.ne.s32.totalorder %s350, %s351
      %p363 = scmp.eq.s32.totalorder %s37, 1
      %p364 = por %p362, %p363
      %p366 = scmp.ne.s32.totalorder %s351, %s365
      %p367 = scmp.eq.s32.totalorder %s37, 0
      %p368 = por %p366, %p367
      %s370 = sadd.s32 %s369, 1
      %p373 = scmp.eq.s32.totalorder %s31, 1
      %p374 = scmp.ne.s32.totalorder %s369, %s371
      %p375 = scmp.eq.s32.totalorder %s31, 0
      %p376 = por %p374, %p375
      %p377 = scmp.ne.s32.totalorder %s369, %s371
      %p378 = scmp.eq.s32.totalorder %s36, 1
      %p379 = por %p377, %p378
      %p380 = scmp.ne.s32.totalorder %s371, %s372
      %p381 = scmp.eq.s32.totalorder %s36, 0
      %p382 = por %p380, %p381
      %p383 = scmp.ne.s32.totalorder %s371, %s372
      %p384 = scmp.eq.s32.totalorder %s37, 1
      %p385 = por %p383, %p384
      %p387 = scmp.ne.s32.totalorder %s372, %s386
      %p388 = scmp.eq.s32.totalorder %s37, 0
      %p389 = por %p387, %p388
      %s391 = sadd.s32 %s390, 1
      %p394 = scmp.eq.s32.totalorder %s31, 1
      %p395 = scmp.ne.s32.totalorder %s390, %s392
      %p396 = scmp.eq.s32.totalorder %s31, 0
      %p397 = por %p395, %p396
      %p398 = scmp.ne.s32.totalorder %s390, %s392
      %p399 = scmp.eq.s32.totalorder %s36, 1
      %p400 = por %p398, %p399
      %p401 = scmp.ne.s32.totalorder %s392, %s393
      %p402 = scmp.eq.s32.totalorder %s36, 0
      %p403 = por %p401, %p402
      %p404 = scmp.ne.s32.totalorder %s392, %s393
      %p405 = scmp.eq.s32.totalorder %s37, 1
      %p406 = por %p404, %p405
      %p408 = scmp.ne.s32.totalorder %s393, %s407
      %p409 = scmp.eq.s32.totalorder %s37, 0
      %p410 = por %p408, %p409
      %s412 = sadd.s32 %s411, 1
      %p415 = scmp.eq.s32.totalorder %s31, 1
      %p416 = scmp.ne.s32.totalorder %s411, %s413
      %p417 = scmp.eq.s32.totalorder %s31, 0
      %p418 = por %p416, %p417
      %p419 = scmp.ne.s32.totalorder %s411, %s413
      %p420 = scmp.eq.s32.totalorder %s36, 1
      %p421 = por %p419, %p420
      %p422 = scmp.ne.s32.totalorder %s413, %s414
      %p423 = scmp.eq.s32.totalorder %s36, 0
      %p424 = por %p422, %p423
      %p425 = scmp.ne.s32.totalorder %s413, %s414
      %p426 = scmp.eq.s32.totalorder %s37, 1
      %p427 = por %p425, %p426
      %p429 = scmp.ne.s32.totalorder %s414, %s428
      %p430 = scmp.eq.s32.totalorder %s37, 0
      %p431 = por %p429, %p430
      %s433 = sadd.s32 %s432, 1
      %p436 = scmp.eq.s32.totalorder %s31, 1
      %p437 = scmp.ne.s32.totalorder %s432, %s434
      %p438 = scmp.eq.s32.totalorder %s31, 0
      %p439 = por %p437, %p438
      %p440 = scmp.ne.s32.totalorder %s432, %s434
      %p441 = scmp.eq.s32.totalorder %s36, 1
      %p442 = por %p440, %p441
      %p443 = scmp.ne.s32.totalorder %s434, %s435
      %p444 = scmp.eq.s32.totalorder %s36, 0
      %p445 = por %p443, %p444
      %p446 = scmp.ne.s32.totalorder %s434, %s435
      %p447 = scmp.eq.s32.totalorder %s37, 1
      %p448 = por %p446, %p447
      %p450 = scmp.ne.s32.totalorder %s435, %s449
      %p451 = scmp.eq.s32.totalorder %s37, 0
      %p452 = por %p450, %p451
      %s454 = sadd.s32 %s453, 1
      %p457 = scmp.eq.s32.totalorder %s31, 1
      %p458 = scmp.ne.s32.totalorder %s453, %s455
      %p459 = scmp.eq.s32.totalorder %s31, 0
      %p460 = por %p458, %p459
      %p461 = scmp.ne.s32.totalorder %s453, %s455
      %p462 = scmp.eq.s32.totalorder %s36, 1
      %p463 = por %p461, %p462
      %p464 = scmp.ne.s32.totalorder %s455, %s456
      %p465 = scmp.eq.s32.totalorder %s36, 0
      %p466 = por %p464, %p465
      %p467 = scmp.ne.s32.totalorder %s455, %s456
      %p468 = scmp.eq.s32.totalorder %s37, 1
      %p469 = por %p467, %p468
      %p471 = scmp.ne.s32.totalorder %s456, %s470
      %p472 = scmp.eq.s32.totalorder %s37, 0
      %p473 = por %p471, %p472
      %s475 = sadd.s32 %s474, 1
      %p478 = scmp.eq.s32.totalorder %s31, 1
      %p479 = scmp.ne.s32.totalorder %s474, %s476
      %p480 = scmp.eq.s32.totalorder %s31, 0
      %p481 = por %p479, %p480
      %p482 = scmp.ne.s32.totalorder %s474, %s476
      %p483 = scmp.eq.s32.totalorder %s36, 1
      %p484 = por %p482, %p483
      %p485 = scmp.ne.s32.totalorder %s476, %s477
      %p486 = scmp.eq.s32.totalorder %s36, 0
      %p487 = por %p485, %p486
      %p488 = scmp.ne.s32.totalorder %s476, %s477
      %p489 = scmp.eq.s32.totalorder %s37, 1
      %p490 = por %p488, %p489
      %p492 = scmp.ne.s32.totalorder %s477, %s491
      %p493 = scmp.eq.s32.totalorder %s37, 0
      %p494 = por %p492, %p493
      %s495 = ssub.s32 %s31, %s38
      %p496 = scmp.eq.s32.totalorder %s495, 0
      %s498 = sadd.s32 %s497, 1
      %s499 = scalar_select %p496, %s497, %s498
      %p502 = pneg %p496
      %p503 = scmp.eq.s32.totalorder %s31, 1
      %p504 = por %p502, %p503
      %p505 = scmp.ne.s32.totalorder %s497, %s500
      %p506 = scmp.eq.s32.totalorder %s31, 0
      %p507 = por %p505, %p506
      %p508 = scmp.ne.s32.totalorder %s497, %s500
      %p509 = scmp.eq.s32.totalorder %s36, 1
      %p510 = por %p508, %p509
      %p511 = scmp.ne.s32.totalorder %s500, %s501
      %p512 = scmp.eq.s32.totalorder %s36, 0
      %p513 = por %p511, %p512
      %p514 = scmp.ne.s32.totalorder %s500, %s501
      %p515 = scmp.eq.s32.totalorder %s37, 1
      %p516 = por %p514, %p515
      %p518 = scmp.ne.s32.totalorder %s501, %s517
      %p519 = scmp.eq.s32.totalorder %s37, 0
      %p520 = por %p518, %p519
      %p521 = scmp.le.s32.totalorder 1, %s31
      %p522 = scmp.lt.s32.totalorder %s31, 3
      %p523 = pnand %p521, %p522
      %p524 = pneg %p523
      // Predicated region
      $region9: #{tpu_custom_call.1} parent=5 // pred_check
        _
      $region10: #{tpu_custom_call.1} parent=5 // pred_check_branch
        %526 = sbr.rel (%p523) target = $region12
      $region11: #{tpu_custom_call.1} parent=5 // pred_region
        %s527 = ssub.s32 %s31, 1
        // Predicated region
        $region13: #{tpu_custom_call.1} parent=11 // pred_check
          %p528 = pneg %p130
        $region14: #{tpu_custom_call.1} parent=11 // pred_check_branch
          %530 = sbr.rel (%p528) target = $region16
        $region15: #{tpu_custom_call.1} parent=11 // pred_region
          _
        $region16: #{tpu_custom_call.1} parent=11 // pred_fallthru
          _
        // Predicated region
        $region17: #{tpu_custom_call.1} parent=11 // pred_check
          %p531 = pneg %p151
        $region18: #{tpu_custom_call.1} parent=11 // pred_check_branch
          %533 = sbr.rel (%p531) target = $region20
        $region19: #{tpu_custom_call.1} parent=11 // pred_region
          %535 = vsyncadd [#allocation4], 0
          %s537 = sshll.u32 %s4, 4
          %s538 = int_to_ptr.hbm [resolvable:$true] %s537
          %s539 = sshll.u32 [#allocation3], 4
          %s540 = int_to_ptr.vmem [resolvable:$true] %s539
          %542 = dma.hbm_to_vmem [thread:$0]  %s538, 128, %s540, [#allocation4]
        $region20: #{tpu_custom_call.1} parent=11 // pred_fallthru
          _
        // Predicated region
        $region21: #{tpu_custom_call.1} parent=11 // pred_check
          %p543 = pneg %p172
        $region22: #{tpu_custom_call.1} parent=11 // pred_check_branch
          %545 = sbr.rel (%p543) target = $region24
        $region23: #{tpu_custom_call.1} parent=11 // pred_region
          _
        $region24: #{tpu_custom_call.1} parent=11 // pred_fallthru
          _
        // Predicated region
        $region25: #{tpu_custom_call.1} parent=11 // pred_check
          %p546 = pneg %p193
        $region26: #{tpu_custom_call.1} parent=11 // pred_check_branch
          %548 = sbr.rel (%p546) target = $region28
        $region27: #{tpu_custom_call.1} parent=11 // pred_region
          _
        $region28: #{tpu_custom_call.1} parent=11 // pred_fallthru
          _
        // Predicated region
        $region29: #{tpu_custom_call.1} parent=11 // pred_check
          %p549 = pneg %p214
        $region30: #{tpu_custom_call.1} parent=11 // pred_check_branch
          %551 = sbr.rel (%p549) target = $region32
        $region31: #{tpu_custom_call.1} parent=11 // pred_region
          _
        $region32: #{tpu_custom_call.1} parent=11 // pred_fallthru
          _
        // Predicated region
        $region33: #{tpu_custom_call.1} parent=11 // pred_check
          %p552 = pneg %p235
        $region34: #{tpu_custom_call.1} parent=11 // pred_check_branch
          %554 = sbr.rel (%p552) target = $region36
        $region35: #{tpu_custom_call.1} parent=11 // pred_region
          _
        $region36: #{tpu_custom_call.1} parent=11 // pred_fallthru
          _
        // Predicated region
        $region37: #{tpu_custom_call.1} parent=11 // pred_check
          %p555 = pneg %p256
        $region38: #{tpu_custom_call.1} parent=11 // pred_check_branch
          %557 = sbr.rel (%p555) target = $region40
        $region39: #{tpu_custom_call.1} parent=11 // pred_region
          _
        $region40: #{tpu_custom_call.1} parent=11 // pred_fallthru
          _
        // Predicated region
        $region41: #{tpu_custom_call.1} parent=11 // pred_check
          %p558 = pneg %p277
        $region42: #{tpu_custom_call.1} parent=11 // pred_check_branch
          %560 = sbr.rel (%p558) target = $region44
        $region43: #{tpu_custom_call.1} parent=11 // pred_region
          _
        $region44: #{tpu_custom_call.1} parent=11 // pred_fallthru
          _
        // Predicated region
        $region45: #{tpu_custom_call.1} parent=11 // pred_check
          %p561 = pneg %p298
        $region46: #{tpu_custom_call.1} parent=11 // pred_check_branch
          %563 = sbr.rel (%p561) target = $region48
        $region47: #{tpu_custom_call.1} parent=11 // pred_region
          %565 = vsyncadd [#allocation6], 0
          %s566 = sshll.u32 %s11, 4
          %s567 = int_to_ptr.hbm [resolvable:$true] %s566
          %s568 = sshll.u32 [#allocation5], 4
          %s569 = int_to_ptr.vmem [resolvable:$true] %s568
          %574 = dma.hbm_to_vmem [thread:$0]  %s567, 512, %s569, [#allocation6], 128, 128, 8
        $region48: #{tpu_custom_call.1} parent=11 // pred_fallthru
          _
        // Predicated region
        $region49: #{tpu_custom_call.1} parent=11 // pred_check
          %p575 = pneg %p319
        $region50: #{tpu_custom_call.1} parent=11 // pred_check_branch
          %577 = sbr.rel (%p575) target = $region52
        $region51: #{tpu_custom_call.1} parent=11 // pred_region
          _
        $region52: #{tpu_custom_call.1} parent=11 // pred_fallthru
          _
        // Predicated region
        $region53: #{tpu_custom_call.1} parent=11 // pred_check
          %p578 = pneg %p340
        $region54: #{tpu_custom_call.1} parent=11 // pred_check_branch
          %580 = sbr.rel (%p578) target = $region56
        $region55: #{tpu_custom_call.1} parent=11 // pred_region
          _
        $region56: #{tpu_custom_call.1} parent=11 // pred_fallthru
          _
        // Predicated region
        $region57: #{tpu_custom_call.1} parent=11 // pred_check
          %p581 = pneg %p361
        $region58: #{tpu_custom_call.1} parent=11 // pred_check_branch
          %583 = sbr.rel (%p581) target = $region60
        $region59: #{tpu_custom_call.1} parent=11 // pred_region
          _
        $region60: #{tpu_custom_call.1} parent=11 // pred_fallthru
          _
        // Predicated region
        $region61: #{tpu_custom_call.1} parent=11 // pred_check
          %p584 = pneg %p382
        $region62: #{tpu_custom_call.1} parent=11 // pred_check_branch
          %586 = sbr.rel (%p584) target = $region64
        $region63: #{tpu_custom_call.1} parent=11 // pred_region
          _
        $region64: #{tpu_custom_call.1} parent=11 // pred_fallthru
          _
        // Predicated region
        $region65: #{tpu_custom_call.1} parent=11 // pred_check
          %p587 = pneg %p403
        $region66: #{tpu_custom_call.1} parent=11 // pred_check_branch
          %589 = sbr.rel (%p587) target = $region68
        $region67: #{tpu_custom_call.1} parent=11 // pred_region
          _
        $region68: #{tpu_custom_call.1} parent=11 // pred_fallthru
          _
        // Predicated region
        $region69: #{tpu_custom_call.1} parent=11 // pred_check
          %p590 = pneg %p424
        $region70: #{tpu_custom_call.1} parent=11 // pred_check_branch
          %592 = sbr.rel (%p590) target = $region72
        $region71: #{tpu_custom_call.1} parent=11 // pred_region
          _
        $region72: #{tpu_custom_call.1} parent=11 // pred_fallthru
          _
        // Predicated region
        $region73: #{tpu_custom_call.1} parent=11 // pred_check
          %p593 = pneg %p445
        $region74: #{tpu_custom_call.1} parent=11 // pred_check_branch
          %595 = sbr.rel (%p593) target = $region76
        $region75: #{tpu_custom_call.1} parent=11 // pred_region
          _
        $region76: #{tpu_custom_call.1} parent=11 // pred_fallthru
          _
        // Predicated region
        $region77: #{tpu_custom_call.1} parent=11 // pred_check
          %p596 = pneg %p466
        $region78: #{tpu_custom_call.1} parent=11 // pred_check_branch
          %598 = sbr.rel (%p596) target = $region80
        $region79: #{tpu_custom_call.1} parent=11 // pred_region
          _
        $region80: #{tpu_custom_call.1} parent=11 // pred_fallthru
          _
        // Predicated region
        $region81: #{tpu_custom_call.1} parent=11 // pred_check
          %p599 = pneg %p487
        $region82: #{tpu_custom_call.1} parent=11 // pred_check_branch
          %601 = sbr.rel (%p599) target = $region84
        $region83: #{tpu_custom_call.1} parent=11 // pred_region
          _
        $region84: #{tpu_custom_call.1} parent=11 // pred_fallthru
          _
      $region12: #{tpu_custom_call.1} parent=5 // pred_fallthru
        _
      %p602 = scmp.lt.s32.totalorder %s31, 2
      // Predicated region
      $region85: #{tpu_custom_call.1} parent=5 // pred_check
        %p603 = pneg %p602
      $region86: #{tpu_custom_call.1} parent=5 // pred_check_branch
        %605 = sbr.rel (%p603) target = $region88
      $region87: #{tpu_custom_call.1} parent=5 // pred_region
        // Predicated region
        $region89: #{tpu_custom_call.1} parent=87 // pred_check
          %p606 = pneg %p51
        $region90: #{tpu_custom_call.1} parent=87 // pred_check_branch
          %608 = sbr.rel (%p606) target = $region92
        $region91: #{tpu_custom_call.1} parent=87 // pred_region
          %p609 = scmp.lt.s32.totalorder %s31, 1
          %s610 = scalar_select %p609, %s31, 1
          %s611 = smul.addr %s610, 8
          %s612 = scalar_lea.vmem %s0, %s611
        $region92: #{tpu_custom_call.1} parent=87 // pred_fallthru
          _
        // Predicated region
        $region93: #{tpu_custom_call.1} parent=87 // pred_check
          %p613 = pneg %p77
        $region94: #{tpu_custom_call.1} parent=87 // pred_check_branch
          %615 = sbr.rel (%p613) target = $region96
        $region95: #{tpu_custom_call.1} parent=87 // pred_region
          %p616 = scmp.lt.s32.totalorder %s31, 1
          %s617 = scalar_select %p616, %s31, 1
          %s618 = smul.addr %s617, 2
          %s619 = smul.addr %s618, 8
          %s620 = scalar_lea.vmem %s1, %s619
        $region96: #{tpu_custom_call.1} parent=87 // pred_fallthru
          _
        // Predicated region
        $region97: #{tpu_custom_call.1} parent=87 // pred_check
          %p621 = pneg %p103
        $region98: #{tpu_custom_call.1} parent=87 // pred_check_branch
          %623 = sbr.rel (%p621) target = $region100
        $region99: #{tpu_custom_call.1} parent=87 // pred_region
          %p624 = scmp.lt.s32.totalorder %s31, 1
          %s625 = scalar_select %p624, %s31, 1
          %s626 = smul.addr %s625, 8
          %s627 = scalar_lea.vmem %s2, %s626
        $region100: #{tpu_custom_call.1} parent=87 // pred_fallthru
          _
      $region88: #{tpu_custom_call.1} parent=5 // pred_fallthru
        _
      %p628 = scmp.le.s32.totalorder 1, %s31
      %p629 = scmp.lt.s32.totalorder %s31, 3
      %p630 = pnand %p628, %p629
      %p631 = pneg %p630
      // Predicated region
      $region101: #{tpu_custom_call.1} parent=5 // pred_check
        _
      $region102: #{tpu_custom_call.1} parent=5 // pred_check_branch
        %633 = sbr.rel (%p630) target = $region104
      $region103: #{tpu_custom_call.1} parent=5 // pred_region
        %s634 = ssub.s32 %s31, 1
        // Predicated region
        $region105: #{tpu_custom_call.1} parent=103 // pred_check
          %p635 = pneg %p151
        $region106: #{tpu_custom_call.1} parent=103 // pred_check_branch
          %637 = sbr.rel (%p635) target = $region108
        $region107: #{tpu_custom_call.1} parent=103 // pred_region
          %639 = dma.done [#allocation4], 128
        $region108: #{tpu_custom_call.1} parent=103 // pred_fallthru
          _
        // Predicated region
        $region109: #{tpu_custom_call.1} parent=103 // pred_check
          %p640 = pneg %p298
        $region110: #{tpu_custom_call.1} parent=103 // pred_check_branch
          %642 = sbr.rel (%p640) target = $region112
        $region111: #{tpu_custom_call.1} parent=103 // pred_region
          %644 = dma.done [#allocation6], 512
        $region112: #{tpu_custom_call.1} parent=103 // pred_fallthru
          _
        %p645 = scmp.lt.s32.totalorder %s36, 1
        %s646 = scalar_select %p645, %s36, 1
        %s647 = smul.addr %s646, 8
        %s648 = scalar_lea.vmem %s0, %s647
        %p649 = pneg %p57
        %p650 = pneg %p54
        %p651 = scmp.lt.s32.totalorder %s36, 1
        %s652 = scalar_select %p651, %s36, 1
        %s653 = smul.addr %s652, 2
        %s654 = smul.addr %s653, 8
        %s655 = scalar_lea.vmem %s1, %s654
        %p656 = pneg %p83
        %p657 = pneg %p80
        %p658 = scmp.lt.s32.totalorder %s36, 1
        %s659 = scalar_select %p658, %s36, 1
        %s660 = smul.addr %s659, 8
        %s661 = scalar_lea.vmem %s2, %s660
        %p662 = pneg %p109
        %p663 = pneg %p106
        %p664 = pneg %p130
        %p665 = pneg %p127
        %p666 = pneg %p151
        %p667 = pneg %p148
        %p668 = pneg %p172
        %p669 = pneg %p169
        %p670 = pneg %p193
        %p671 = pneg %p190
        %p672 = pneg %p214
        %p673 = pneg %p211
        %p674 = pneg %p235
        %p675 = pneg %p232
        %p676 = pneg %p256
        %p677 = pneg %p253
        %p678 = pneg %p277
        %p679 = pneg %p274
        %p680 = pneg %p298
        %p681 = pneg %p295
        %p682 = pneg %p319
        %p683 = pneg %p316
        %p684 = pneg %p340
        %p685 = pneg %p337
        %p686 = pneg %p361
        %p687 = pneg %p358
        %p688 = pneg %p382
        %p689 = pneg %p379
        %p690 = pneg %p403
        %p691 = pneg %p400
        %p692 = pneg %p424
        %p693 = pneg %p421
        %p694 = pneg %p445
        %p695 = pneg %p442
        %p696 = pneg %p466
        %p697 = pneg %p463
        %p698 = pneg %p487
        %p699 = pneg %p484
        %p700 = pneg %p513
        %p701 = pneg %p510
        %p702 = scmp.lt.s32.totalorder %s36, 1
        %s703 = scalar_select %p702, %s36, 1
        %s704 = scalar_lea.vmem %s21, %s703
        %p705 = scmp.lt.s32.totalorder %s36, 1
        %s706 = scalar_select %p705, %s36, 1
        %s707 = smul.addr %s706, 8
        %s708 = scalar_lea.vmem %s0, %s707
        %p709 = scmp.lt.s32.totalorder %s36, 1
        %s710 = scalar_select %p709, %s36, 1
        %s711 = smul.addr %s710, 2
        %s712 = smul.addr %s711, 8
        %s713 = scalar_lea.vmem %s1, %s712
        %p714 = scmp.lt.s32.totalorder %s36, 1
        %s715 = scalar_select %p714, %s36, 1
        %s716 = smul.addr %s715, 8
        %s717 = scalar_lea.vmem %s2, %s716
        %p718 = scmp.lt.s32.totalorder %s36, 1
        %s719 = scalar_select %p718, %s36, 1
        %s720 = scalar_lea.vmem %s21, %s719
        %v721 = vld [vmem:[%s708] sm:$0xff]
        %v722 = vld [vmem:[%s6] sm:$0xff]
        %v723 = vld [vmem:[%s6 + $0x8] sm:$0xff]
        %v724 = vld [vmem:[%s6 + $0x10] sm:$0xff]
        %v725 = vld [vmem:[%s6 + $0x18] sm:$0xff]
        %v726 = vld [vmem:[%s7] sm:$0x1]
        %v727 = vld [vmem:[%s3] sm:$0xff]
        %v728 = vld [vmem:[%s5] sm:$0x1]
        %v730 = vperm.slane %v728, 0
        %vm732 = vcmask 64512
        %v734 = vsel %vm732, %v721, 0
        %736 = vmatpush.msra.mxu0 0.0
        %737 = vmatpush.msra.mxu0 0.0
        %738 = vmatpush.msra.mxu0 0.0
        %739 = vmatpush.msra.mxu0 0.0
        %740 = vmatpush.msra.mxu0 0.0
        %741 = vmatpush.msra.mxu0 0.0
        %742 = vmatpush.msra.mxu0 0.0
        %743 = vmatpush.msra.mxu0 0.0
        %744 = vmatpush.msra.mxu0 0.0
        %745 = vmatpush.msra.mxu0 0.0
        %746 = vmatpush.msra.mxu0 0.0
        %747 = vmatpush.msra.mxu0 0.0
        %748 = vmatpush.msra.mxu0 0.0
        %749 = vmatpush.msra.mxu0 0.0
        %750 = vmatpush.msra.mxu0 0.0
        %751 = vmatpush.msra.mxu0 %v727
        %752 = vmatmul.f32.gmra.mxu0 %v734
        %v753 = vpop.f32.mrf.mxu0
        %v754 = vadd.f32 %v730, %v753
        %755 = vdwg.mxu0
        %v756 = vld [vmem:[#allocation3] sm:$0xff]
        %757 = vmatpush.msra.mxu0 0.0
        %758 = vmatpush.msra.mxu0 0.0
        %759 = vmatpush.msra.mxu0 0.0
        %760 = vmatpush.msra.mxu0 0.0
        %761 = vmatpush.msra.mxu0 0.0
        %762 = vmatpush.msra.mxu0 0.0
        %763 = vmatpush.msra.mxu0 0.0
        %764 = vmatpush.msra.mxu0 0.0
        %765 = vmatpush.msra.mxu0 0.0
        %766 = vmatpush.msra.mxu0 0.0
        %767 = vmatpush.msra.mxu0 0.0
        %768 = vmatpush.msra.mxu0 0.0
        %769 = vmatpush.msra.mxu0 0.0
        %770 = vmatpush.msra.mxu0 0.0
        %771 = vmatpush.msra.mxu0 0.0
        %772 = vmatpush.msra.mxu0 %v756
        %773 = vmatmul.f32.gmra.mxu0 %v734
        %v774 = vpop.f32.mrf.mxu0
        %v775 = vadd.f32 0.0, %v774
        %776 = vdwg.mxu0
        %v777 = vld [vmem:[%s713] sm:$0xff]
        %v779 = vsel %vm732, %v777, 0
        %781 = vmatpush.msra.mxu0 0.0
        %782 = vmatpush.msra.mxu0 0.0
        %783 = vmatpush.msra.mxu0 0.0
        %784 = vmatpush.msra.mxu0 0.0
        %785 = vmatpush.msra.mxu0 0.0
        %786 = vmatpush.msra.mxu0 0.0
        %787 = vmatpush.msra.mxu0 0.0
        %788 = vmatpush.msra.mxu0 0.0
        %789 = vmatpush.msra.mxu0 0.0
        %790 = vmatpush.msra.mxu0 0.0
        %791 = vmatpush.msra.mxu0 0.0
        %792 = vmatpush.msra.mxu0 0.0
        %793 = vmatpush.msra.mxu0 0.0
        %794 = vmatpush.msra.mxu0 0.0
        %795 = vmatpush.msra.mxu0 0.0
        %796 = vmatpush.msra.mxu0 %v775
        %797 = vmatmul.f32.gmra.mxu0 %v779
        %v798 = vpop.f32.mrf.mxu0
        %v799 = vadd.f32 0.0, %v798
        %800 = vdwg.mxu0
        %v801 = vadd.f32 %v754, %v799
        %v802 = vmax.f32 %v801, 0.0
        %v804 = vperm.slane %v726, 0
        %vm806 = vcmask 261120
        %v808 = vsel %vm806, %v802, 0
        %810 = vmatpush.msra.mxu0 0.0
        %811 = vmatpush.msra.mxu0 0.0
        %812 = vmatpush.msra.mxu0 0.0
        %813 = vmatpush.msra.mxu0 0.0
        %814 = vmatpush.msra.mxu0 0.0
        %815 = vmatpush.msra.mxu0 0.0
        %816 = vmatpush.msra.mxu0 0.0
        %817 = vmatpush.msra.mxu0 0.0
        %818 = vmatpush.msra.mxu0 0.0
        %819 = vmatpush.msra.mxu0 0.0
        %820 = vmatpush.msra.mxu0 0.0
        %821 = vmatpush.msra.mxu0 0.0
        %822 = vmatpush.msra.mxu0 %v725
        %823 = vmatpush.msra.mxu0 %v724
        %824 = vmatpush.msra.mxu0 %v723
        %825 = vmatpush.msra.mxu0 %v722
        %826 = vmatmul.f32.gmra.mxu0 %v808
        %v827 = vpop.f32.mrf.mxu0
        %v828 = vadd.f32 %v804, %v827
        %829 = vdwg.mxu0
        %v830 = vmax.f32 %v828, 0.0
        %v831 = vld [vmem:[%s717] sm:$0xff]
        %833 = vset.pattern.permute.xlu0 0
        %834 = vperm.xlu0 %833, %v831
        %v835 = vpop.permute.xlu0 %834
        %v837 = vadd.f32 %v830, %v835
        %s838 = scalar_lea.vmem %s713, 8
        %v839 = vld [vmem:[%s838] sm:$0xff]
        %v841 = vsel %vm732, %v839, 0
        %843 = vmatpush.msra.mxu0 0.0
        %844 = vmatpush.msra.mxu0 0.0
        %845 = vmatpush.msra.mxu0 0.0
        %846 = vmatpush.msra.mxu0 0.0
        %847 = vmatpush.msra.mxu0 0.0
        %848 = vmatpush.msra.mxu0 0.0
        %849 = vmatpush.msra.mxu0 0.0
        %850 = vmatpush.msra.mxu0 0.0
        %851 = vmatpush.msra.mxu0 0.0
        %852 = vmatpush.msra.mxu0 0.0
        %853 = vmatpush.msra.mxu0 0.0
        %854 = vmatpush.msra.mxu0 0.0
        %855 = vmatpush.msra.mxu0 0.0
        %856 = vmatpush.msra.mxu0 0.0
        %857 = vmatpush.msra.mxu0 0.0
        %858 = vmatpush.msra.mxu0 %v775
        %859 = vmatmul.f32.gmra.mxu0 %v841
        %v860 = vpop.f32.mrf.mxu0
        %v861 = vadd.f32 0.0, %v860
        %862 = vdwg.mxu0
        %v863 = vadd.f32 %v754, %v861
        %v864 = vmax.f32 %v863, 0.0
        %v866 = vsel %vm806, %v864, 0
        %868 = vmatpush.msra.mxu0 0.0
        %869 = vmatpush.msra.mxu0 0.0
        %870 = vmatpush.msra.mxu0 0.0
        %871 = vmatpush.msra.mxu0 0.0
        %872 = vmatpush.msra.mxu0 0.0
        %873 = vmatpush.msra.mxu0 0.0
        %874 = vmatpush.msra.mxu0 0.0
        %875 = vmatpush.msra.mxu0 0.0
        %876 = vmatpush.msra.mxu0 0.0
        %877 = vmatpush.msra.mxu0 0.0
        %878 = vmatpush.msra.mxu0 0.0
        %879 = vmatpush.msra.mxu0 0.0
        %880 = vmatpush.msra.mxu0 %v725
        %881 = vmatpush.msra.mxu0 %v724
        %882 = vmatpush.msra.mxu0 %v723
        %883 = vmatpush.msra.mxu0 %v722
        %884 = vmatmul.f32.gmra.mxu0 %v866
        %v885 = vpop.f32.mrf.mxu0
        %v886 = vadd.f32 %v804, %v885
        %887 = vdwg.mxu0
        %v888 = vmax.f32 %v886, 0.0
        %889 = vset.pattern.permute.xlu0 1
        %890 = vperm.xlu0 %889, %v831
        %v891 = vpop.permute.xlu0 %890
        %v893 = vadd.f32 %v888, %v891
        %v894 = vmax.f32 %v837, %v893
        %v895 = vld [vmem:[#allocation5] sm:$0xff]
        %v896 = vld [vmem:[#allocation5 + $0x8] sm:$0xff]
        %v897 = vld [vmem:[#allocation5 + $0x10] sm:$0xff]
        %v898 = vld [vmem:[#allocation5 + $0x18] sm:$0xff]
        %v899 = vld [vmem:[%s12] sm:$0x1]
        %v900 = vld [vmem:[%s8] sm:$0xff]
        %v901 = vld [vmem:[%s8 + $0x8] sm:$0xff]
        %v902 = vld [vmem:[%s8 + $0x10] sm:$0xff]
        %v903 = vld [vmem:[%s8 + $0x18] sm:$0xff]
        %v904 = vld [vmem:[%s10] sm:$0x1]
        %v906 = vperm.slane %v904, 0
        %v909 = vsel %vm806, %v894, 0
        %911 = vmatpush.msra.mxu0 0.0
        %912 = vmatpush.msra.mxu0 0.0
        %913 = vmatpush.msra.mxu0 0.0
        %914 = vmatpush.msra.mxu0 0.0
        %915 = vmatpush.msra.mxu0 0.0
        %916 = vmatpush.msra.mxu0 0.0
        %917 = vmatpush.msra.mxu0 0.0
        %918 = vmatpush.msra.mxu0 0.0
        %919 = vmatpush.msra.mxu0 0.0
        %920 = vmatpush.msra.mxu0 0.0
        %921 = vmatpush.msra.mxu0 0.0
        %922 = vmatpush.msra.mxu0 0.0
        %923 = vmatpush.msra.mxu0 %v903
        %924 = vmatpush.msra.mxu0 %v902
        %925 = vmatpush.msra.mxu0 %v901
        %926 = vmatpush.msra.mxu0 %v900
        %927 = vmatmul.f32.gmra.mxu0 %v909
        %v928 = vpop.f32.mrf.mxu0
        %v929 = vadd.f32 %v906, %v928
        %930 = vdwg.mxu0
        %v931 = vld [vmem:[%s9] sm:$0xff]
        %v932 = vld [vmem:[%s9 + $0x8] sm:$0xff]
        %v933 = vld [vmem:[%s9 + $0x10] sm:$0xff]
        %v934 = vld [vmem:[%s9 + $0x18] sm:$0xff]
        %935 = vmatpush.msra.mxu0 0.0
        %936 = vmatpush.msra.mxu0 0.0
        %937 = vmatpush.msra.mxu0 0.0
        %938 = vmatpush.msra.mxu0 0.0
        %939 = vmatpush.msra.mxu0 0.0
        %940 = vmatpush.msra.mxu0 0.0
        %941 = vmatpush.msra.mxu0 0.0
        %942 = vmatpush.msra.mxu0 0.0
        %943 = vmatpush.msra.mxu0 0.0
        %944 = vmatpush.msra.mxu0 0.0
        %945 = vmatpush.msra.mxu0 0.0
        %946 = vmatpush.msra.mxu0 0.0
        %947 = vmatpush.msra.mxu0 %v934
        %948 = vmatpush.msra.mxu0 %v933
        %949 = vmatpush.msra.mxu0 %v932
        %950 = vmatpush.msra.mxu0 %v931
        %951 = vmatmul.f32.gmra.mxu0 %v909
        %v952 = vpop.f32.mrf.mxu0
        %v953 = vadd.f32 0.0, %v952
        %954 = vdwg.mxu0
        %955 = vmatpush.msra.mxu0 0.0
        %956 = vmatpush.msra.mxu0 0.0
        %957 = vmatpush.msra.mxu0 0.0
        %958 = vmatpush.msra.mxu0 0.0
        %959 = vmatpush.msra.mxu0 0.0
        %960 = vmatpush.msra.mxu0 0.0
        %961 = vmatpush.msra.mxu0 0.0
        %962 = vmatpush.msra.mxu0 0.0
        %963 = vmatpush.msra.mxu0 0.0
        %964 = vmatpush.msra.mxu0 0.0
        %965 = vmatpush.msra.mxu0 0.0
        %966 = vmatpush.msra.mxu0 0.0
        %967 = vmatpush.msra.mxu0 0.0
        %968 = vmatpush.msra.mxu0 0.0
        %969 = vmatpush.msra.mxu0 0.0
        %970 = vmatpush.msra.mxu0 %v953
        %971 = vmatmul.f32.gmra.mxu0 %v779
        %v972 = vpop.f32.mrf.mxu0
        %v973 = vadd.f32 0.0, %v972
        %974 = vdwg.mxu0
        %v975 = vadd.f32 %v929, %v973
        %v976 = vmax.f32 %v975, 0.0
        %v978 = vperm.slane %v899, 0
        %v981 = vsel %vm806, %v976, 0
        %983 = vmatpush.msra.mxu0 0.0
        %984 = vmatpush.msra.mxu0 0.0
        %985 = vmatpush.msra.mxu0 0.0
        %986 = vmatpush.msra.mxu0 0.0
        %987 = vmatpush.msra.mxu0 0.0
        %988 = vmatpush.msra.mxu0 0.0
        %989 = vmatpush.msra.mxu0 0.0
        %990 = vmatpush.msra.mxu0 0.0
        %991 = vmatpush.msra.mxu0 0.0
        %992 = vmatpush.msra.mxu0 0.0
        %993 = vmatpush.msra.mxu0 0.0
        %994 = vmatpush.msra.mxu0 0.0
        %995 = vmatpush.msra.mxu0 %v898
        %996 = vmatpush.msra.mxu0 %v897
        %997 = vmatpush.msra.mxu0 %v896
        %998 = vmatpush.msra.mxu0 %v895
        %999 = vmatmul.f32.gmra.mxu0 %v981
        %v1000 = vpop.f32.mrf.mxu0
        %v1001 = vadd.f32 %v978, %v1000
        %1002 = vdwg.mxu0
        %v1003 = vmax.f32 %v1001, 0.0
        %v1004 = vadd.f32 %v1003, %v835
        %1005 = vmatpush.msra.mxu0 0.0
        %1006 = vmatpush.msra.mxu0 0.0
        %1007 = vmatpush.msra.mxu0 0.0
        %1008 = vmatpush.msra.mxu0 0.0
        %1009 = vmatpush.msra.mxu0 0.0
        %1010 = vmatpush.msra.mxu0 0.0
        %1011 = vmatpush.msra.mxu0 0.0
        %1012 = vmatpush.msra.mxu0 0.0
        %1013 = vmatpush.msra.mxu0 0.0
        %1014 = vmatpush.msra.mxu0 0.0
        %1015 = vmatpush.msra.mxu0 0.0
        %1016 = vmatpush.msra.mxu0 0.0
        %1017 = vmatpush.msra.mxu0 0.0
        %1018 = vmatpush.msra.mxu0 0.0
        %1019 = vmatpush.msra.mxu0 0.0
        %1020 = vmatpush.msra.mxu0 %v953
        %1021 = vmatmul.f32.gmra.mxu0 %v841
        %v1022 = vpop.f32.mrf.mxu0
        %v1023 = vadd.f32 0.0, %v1022
        %1024 = vdwg.mxu0
        %v1025 = vadd.f32 %v929, %v1023
        %v1026 = vmax.f32 %v1025, 0.0
        %v1028 = vsel %vm806, %v1026, 0
        %1030 = vmatpush.msra.mxu0 0.0
        %1031 = vmatpush.msra.mxu0 0.0
        %1032 = vmatpush.msra.mxu0 0.0
        %1033 = vmatpush.msra.mxu0 0.0
        %1034 = vmatpush.msra.mxu0 0.0
        %1035 = vmatpush.msra.mxu0 0.0
        %1036 = vmatpush.msra.mxu0 0.0
        %1037 = vmatpush.msra.mxu0 0.0
        %1038 = vmatpush.msra.mxu0 0.0
        %1039 = vmatpush.msra.mxu0 0.0
        %1040 = vmatpush.msra.mxu0 0.0
        %1041 = vmatpush.msra.mxu0 0.0
        %1042 = vmatpush.msra.mxu0 %v898
        %1043 = vmatpush.msra.mxu0 %v897
        %1044 = vmatpush.msra.mxu0 %v896
        %1045 = vmatpush.msra.mxu0 %v895
        %1046 = vmatmul.f32.gmra.mxu0 %v1028
        %v1047 = vpop.f32.mrf.mxu0
        %v1048 = vadd.f32 %v978, %v1047
        %1049 = vdwg.mxu0
        %v1050 = vmax.f32 %v1048, 0.0
        %v1051 = vadd.f32 %v1050, %v891
        %v1052 = vmax.f32 %v1004, %v1051
        %1054 = vrot.lane.b32.xlu0 %v1052, 32
        %v1055 = vpop.permute.xlu0 %1054
        %v1057 = vsel %vm806, %v894, %v1055
        %v1058 = vld [vmem:[%s13] sm:$0xff]
        %v1059 = vld [vmem:[%s13 + $0x8] sm:$0xff]
        %v1060 = vld [vmem:[%s13 + $0x10] sm:$0xff]
        %v1061 = vld [vmem:[%s13 + $0x18] sm:$0xff]
        %v1062 = vld [vmem:[%s13 + $0x20] sm:$0xff]
        %v1063 = vld [vmem:[%s13 + $0x28] sm:$0xff]
        %v1064 = vld [vmem:[%s13 + $0x30] sm:$0xff]
        %v1065 = vld [vmem:[%s13 + $0x38] sm:$0xff]
        %v1066 = vld [vmem:[%s14] sm:$0x1]
        %v1068 = vperm.slane %v1066, 0
        %vm1070 = vcmask 523264
        %v1072 = vsel %vm1070, %v1057, 0
        %1074 = vmatpush.msra.mxu0 0.0
        %1075 = vmatpush.msra.mxu0 0.0
        %1076 = vmatpush.msra.mxu0 0.0
        %1077 = vmatpush.msra.mxu0 0.0
        %1078 = vmatpush.msra.mxu0 0.0
        %1079 = vmatpush.msra.mxu0 0.0
        %1080 = vmatpush.msra.mxu0 0.0
        %1081 = vmatpush.msra.mxu0 0.0
        %1082 = vmatpush.msra.mxu0 %v1065
        %1083 = vmatpush.msra.mxu0 %v1064
        %1084 = vmatpush.msra.mxu0 %v1063
        %1085 = vmatpush.msra.mxu0 %v1062
        %1086 = vmatpush.msra.mxu0 %v1061
        %1087 = vmatpush.msra.mxu0 %v1060
        %1088 = vmatpush.msra.mxu0 %v1059
        %1089 = vmatpush.msra.mxu0 %v1058
        %1090 = vmatmul.f32.gmra.mxu0 %v1072
        %v1091 = vpop.f32.mrf.mxu0
        %v1092 = vadd.f32 %v1068, %v1091
        %1093 = vdwg.mxu0
        %v1094 = vmax.f32 %v1092, 0.0
        %v1095 = vsel %vm806, %v1094, 0.0
        %v1096 = vrot.slane %v1095, 4
        %v1097 = vadd.f32 %v1095, %v1096
        %v1098 = vrot.slane %v1097, 2
        %v1099 = vadd.f32 %v1097, %v1098
        %v1100 = vrot.slane %v1099, 1
        %v1101 = vadd.f32 %v1099, %v1100
        %v1102 = vmul.f32 %v1101, 0.125
        %v1103 = vld [vmem:[%s15] sm:$0xff]
        %v1104 = vld [vmem:[%s15 + $0x8] sm:$0xff]
        %v1105 = vld [vmem:[%s15 + $0x10] sm:$0xff]
        %v1106 = vld [vmem:[%s15 + $0x18] sm:$0xff]
        %v1107 = vld [vmem:[%s16] sm:$0x1]
        %v1109 = vsel %vm806, %v1102, 0
        %1111 = vmatpush.msra.mxu0 0.0
        %1112 = vmatpush.msra.mxu0 0.0
        %1113 = vmatpush.msra.mxu0 0.0
        %1114 = vmatpush.msra.mxu0 0.0
        %1115 = vmatpush.msra.mxu0 0.0
        %1116 = vmatpush.msra.mxu0 0.0
        %1117 = vmatpush.msra.mxu0 0.0
        %1118 = vmatpush.msra.mxu0 0.0
        %1119 = vmatpush.msra.mxu0 0.0
        %1120 = vmatpush.msra.mxu0 0.0
        %1121 = vmatpush.msra.mxu0 0.0
        %1122 = vmatpush.msra.mxu0 0.0
        %1123 = vmatpush.msra.mxu0 %v1106
        %1124 = vmatpush.msra.mxu0 %v1105
        %1125 = vmatpush.msra.mxu0 %v1104
        %1126 = vmatpush.msra.mxu0 %v1103
        %1127 = vmatmul.f32.gmra.mxu0 %v1109
        %v1128 = vpop.f32.mrf.mxu0
        %v1129 = vadd.f32 %v1107, %v1128
        %1130 = vdwg.mxu0
        %v1131 = vmax.f32 %v1129, 0.0
        %v1132 = vld [vmem:[%s17] sm:$0xff]
        %v1133 = vld [vmem:[%s18] sm:$0x1]
        %v1135 = vsel %vm732, %v1131, 0
        %1137 = vmatpush.msra.mxu0 0.0
        %1138 = vmatpush.msra.mxu0 0.0
        %1139 = vmatpush.msra.mxu0 0.0
        %1140 = vmatpush.msra.mxu0 0.0
        %1141 = vmatpush.msra.mxu0 0.0
        %1142 = vmatpush.msra.mxu0 0.0
        %1143 = vmatpush.msra.mxu0 0.0
        %1144 = vmatpush.msra.mxu0 0.0
        %1145 = vmatpush.msra.mxu0 0.0
        %1146 = vmatpush.msra.mxu0 0.0
        %1147 = vmatpush.msra.mxu0 0.0
        %1148 = vmatpush.msra.mxu0 0.0
        %1149 = vmatpush.msra.mxu0 0.0
        %1150 = vmatpush.msra.mxu0 0.0
        %1151 = vmatpush.msra.mxu0 0.0
        %1152 = vmatpush.msra.mxu0 %v1132
        %1153 = vmatmul.f32.gmra.mxu0 %v1135
        %v1154 = vpop.f32.mrf.mxu0
        %v1155 = vadd.f32 %v1133, %v1154
        %1156 = vdwg.mxu0
        %v1157 = vmax.f32 %v1155, 0.0
        %v1158 = vld [vmem:[%s19] sm:$0xf]
        %v1159 = vld [vmem:[#allocation2] sm:$0x1]
        %vm1160 = vcmask 31744
        %v1162 = vsel %vm1160, %v1157, 0
        %vm1164 = vcmask 1043456
        %v1166 = vsel %vm1164, %v1158, 0
        %1168 = vmatpush.msra.mxu0 0.0
        %1169 = vmatpush.msra.mxu0 0.0
        %1170 = vmatpush.msra.mxu0 0.0
        %1171 = vmatpush.msra.mxu0 0.0
        %1172 = vmatpush.msra.mxu0 0.0
        %1173 = vmatpush.msra.mxu0 0.0
        %1174 = vmatpush.msra.mxu0 0.0
        %1175 = vmatpush.msra.mxu0 0.0
        %1176 = vmatpush.msra.mxu0 0.0
        %1177 = vmatpush.msra.mxu0 0.0
        %1178 = vmatpush.msra.mxu0 0.0
        %1179 = vmatpush.msra.mxu0 0.0
        %1180 = vmatpush.msra.mxu0 0.0
        %1181 = vmatpush.msra.mxu0 0.0
        %1182 = vmatpush.msra.mxu0 0.0
        %1183 = vmatpush.msra.mxu0 %v1166
        %1184 = vmatmul.f32.gmra.mxu0 %v1162
        %v1185 = vpop.f32.mrf.mxu0
        %v1186 = vadd.f32 %v1159, %v1185
        %1187 = vdwg.mxu0
        %vm1188 = vcmask 0
        %1189 = vst.msk [vmem:[%s720] sm:$0x1] %vm1188, %v1186
        %p1190 = scmp.lt.s32.totalorder %s36, 1
        %s1191 = scalar_select %p1190, %s36, 1
        %s1192 = scalar_lea.vmem %s21, %s1191
        // Predicated region
        $region113: #{tpu_custom_call.1} parent=103 // pred_check
          %p1193 = pneg %p510
        $region114: #{tpu_custom_call.1} parent=103 // pred_check_branch
          %1195 = sbr.rel (%p1193) target = $region116
        $region115: #{tpu_custom_call.1} parent=103 // pred_region
          _
        $region116: #{tpu_custom_call.1} parent=103 // pred_fallthru
          _
      $region104: #{tpu_custom_call.1} parent=5 // pred_fallthru
        _
      %p1196 = scmp.le.s32.totalorder 2, %s31
      // Predicated region
      $region117: #{tpu_custom_call.1} parent=5 // pred_check
        %p1197 = pneg %p1196
      $region118: #{tpu_custom_call.1} parent=5 // pred_check_branch
        %1199 = sbr.rel (%p1197) target = $region120
      $region119: #{tpu_custom_call.1} parent=5 // pred_region
        %s1200 = ssub.s32 %s31, 2
        // Predicated region
        $region121: #{tpu_custom_call.1} parent=119 // pred_check
          %p1201 = pneg %p516
        $region122: #{tpu_custom_call.1} parent=119 // pred_check_branch
          %1203 = sbr.rel (%p1201) target = $region124
        $region123: #{tpu_custom_call.1} parent=119 // pred_region
          %p1204 = scmp.lt.s32.totalorder %s37, 1
          %s1205 = scalar_select %p1204, %s37, 1
          %s1206 = scalar_lea.vmem %s21, %s1205
        $region124: #{tpu_custom_call.1} parent=119 // pred_fallthru
          _
      $region120: #{tpu_custom_call.1} parent=5 // pred_fallthru
        _
    $region6: #{tpu_custom_call.1} parent=1 // loop_footer
      %s35 = sadd.s32 1, %s31
    $region7: #{tpu_custom_call.1} parent=1 // loop_footer_branch
      %30 = sbr.rel target = $region3
    $region8: #{tpu_custom_call.1} parent=1 // loop_exit
      _
    %1207 = vsyncpa [#allocation4], 1
    %s1208 = scalar_lea.sflag [#allocation4], 1
    %1209 = vsyncpa %s1208, 1
    %1210 = vsyncpa [#allocation6], 1

</llo_original>
